<compile_context>
chip_gen: v7x
topology: tpu7x:2x2x1
jax: 0.10.0
libtpu: 0.0.40
codegen_flags: <defaults>
</compile_context>

<pallas_src>
import functools

import jax
import jax.numpy as jnp
from jax.experimental import pallas as pl
from jax.experimental.pallas import tpu as pltpu

_BN_EPS = 1e-5  # PyTorch BatchNorm2d default


def _bottleneck_kernel(x_ref, w1_ref, b1_ref, w2_ref, b2_ref, w3_ref, b3_ref, mask_ref,
                       o_ref, *, H, W, bt):
    """One grid step = `bt` whole images, each processed as a (C, H*W) lane-dense slab."""
    HW = H * W

    for b in range(bt):                          # small static loop over images in the block
        xb = x_ref[b]                            # (Cin, HW) f32

        # ---- cbr1: 1x1 conv (BN folded) + ReLU ------------------------------
        h1 = jnp.dot(w1_ref[...], xb, preferred_element_type=jnp.float32) + b1_ref[...]
        h1 = jnp.maximum(h1, 0.0)                # (Cmid_p, HW)

        # ---- cbr2: 3x3 conv, padding=1 (BN folded) + ReLU -------------------
        # Each tap k=(kh*3+kw) is h1 shifted by s = (kh-1)*W + (kw-1) along the flattened HW
        # lane axis (pltpu.roll -> XLU), with wrapped / out-of-image lanes zeroed by the
        # precomputed (1, HW) boundary mask.  All 9 taps are stacked along the contraction
        # dim and consumed by a single deep-K matmul.
        taps = []
        for k in range(9):
            dh, dw = k // 3 - 1, k % 3 - 1
            shift = (-(dh * W + dw)) % HW
            t = pltpu.roll(h1, shift, 1) if shift else h1
            if k != 4:                           # center tap needs no mask
                t = t * mask_ref[k:k + 1, :]     # (Cmid_p, HW) * (1, HW) broadcast
            taps.append(t)
        tap_stack = jnp.concatenate(taps, axis=0)                      # (9*Cmid_p, HW)
        h2 = jnp.dot(w2_ref[...], tap_stack,
                     preferred_element_type=jnp.float32) + b2_ref[...]
        h2 = jnp.maximum(h2, 0.0)                # (Cmid_p, HW)

        # ---- cb3: 1x1 conv (BN folded), residual add, final ReLU ------------
        y = jnp.dot(w3_ref[...], h2, preferred_element_type=jnp.float32) + b3_ref[...]
        o_ref[b] = jnp.maximum(y + x_ref[b], 0.0)   # re-read x from VMEM; lane-dense store


def bottleneck_identity_psp_pallas(x, params, *, eps=_BN_EPS, target_block_bytes=2 * 1024 * 1024):
    B, Cin, H, W = x.shape
    Cmid = params["w1"].shape[0]
    HW = H * W
    dtype = jnp.float32

    # ---- fold eval-mode BatchNorm into conv weights / biases ---------------
    s1 = params["g1"] / jnp.sqrt(params["v1"] + eps)
    s2 = params["g2"] / jnp.sqrt(params["v2"] + eps)
    s3 = params["g3"] / jnp.sqrt(params["v3"] + eps)

    w1 = (params["w1"] * s1[:, None]).astype(dtype)                    # (Cmid, Cin)
    b1 = (params["be1"] - params["m1"] * s1).astype(dtype)             # (Cmid,)
    w2 = (params["w2"] * s2[:, None, None, None]).astype(dtype)        # (Cmid, Cmid, 3, 3)
    b2 = (params["be2"] - params["m2"] * s2).astype(dtype)             # (Cmid,)
    w3 = (params["w3"] * s3[:, None]).astype(dtype)                    # (Cin, Cmid)
    b3 = (params["be3"] - params["m3"] * s3).astype(dtype)             # (Cin,)

    # ---- pad mid channels to a sublane multiple (exactness preserved: pads are zero) ----
    Cmid_p = ((Cmid + 7) // 8) * 8
    pc = Cmid_p - Cmid
    w1p = jnp.pad(w1, ((0, pc), (0, 0)))                               # (Cmid_p, Cin)
    b1p = jnp.pad(b1, ((0, pc),)).reshape(Cmid_p, 1)
    w2p = jnp.pad(w2, ((0, pc), (0, pc), (0, 0), (0, 0)))              # (Cmid_p, Cmid_p, 3, 3)
    b2p = jnp.pad(b2, ((0, pc),)).reshape(Cmid_p, 1)
    w3p = jnp.pad(w3, ((0, 0), (0, pc)))                               # (Cin, Cmid_p)
    b3p = b3.reshape(Cin, 1)
    # stacked-tap 3x3 weights: w2s[:, k*Cmid_p + c] = w2[:, c, kh, kw] with k = kh*3 + kw
    w2s = jnp.transpose(w2p, (0, 2, 3, 1)).reshape(Cmid_p, 9 * Cmid_p)

    # ---- precomputed spatial boundary masks for the 9 taps (grid-invariant) ----
    lane = jnp.arange(HW, dtype=jnp.int32)
    row, col = lane // W, lane % W
    masks = []
    for k in range(9):
        dh, dw = k // 3 - 1, k % 3 - 1
        m = (row + dh >= 0) & (row + dh <= H - 1) & (col + dw >= 0) & (col + dw <= W - 1)
        masks.append(m.astype(dtype))
    tap_mask = jnp.stack(masks, axis=0)                                # (9, HW)

    # ---- layout: keep the module's natural NCHW layout (free reshape, zero transposes) ----
    x_in = x.reshape(B, Cin, HW).astype(dtype)

    # ---- block sizing: whole images, ~2 MiB per block, >= min(B,4) grid steps ----
    img_bytes = Cin * HW * 4
    min_steps = min(B, 4) if B > 0 else 1       # >=2 steps per v7x TensorCore when B allows
    bt = 1
    for d in range(1, B + 1):
        if B % d == 0 and d * img_bytes <= target_block_bytes and B // d >= min_steps:
            bt = d
    grid = (B // bt,)

    block_bytes = bt * img_bytes
    weight_bytes = 4 * int(w1p.size + b1p.size + w2s.size + b2p.size +
                           w3p.size + b3p.size + tap_mask.size)
    # 2x double-buffered input block + 2x output block + (conservatively 2x) constants + slack
    vmem_needed = 4 * block_bytes + 2 * weight_bytes + (2 << 20)
    vmem_limit = max(vmem_needed, 16 * 1024 * 1024)

    kernel = functools.partial(_bottleneck_kernel, H=H, W=W, bt=bt)

    def build(single_buffer_consts):
        if single_buffer_consts:
            def const(shape):
                return pl.BlockSpec(shape, lambda i: (0,) * len(shape),
                                    pipeline_mode=pl.Buffered(1))
        else:
            def const(shape):
                return pl.BlockSpec(shape, lambda i: (0,) * len(shape))

        return pl.pallas_call(
            kernel,
            out_shape=jax.ShapeDtypeStruct((B, Cin, HW), dtype),
            grid=grid,
            in_specs=[
                pl.BlockSpec((bt, Cin, HW), lambda i: (i, 0, 0)),      # x: bt whole images
                const((Cmid_p, Cin)), const((Cmid_p, 1)),              # conv1 (BN folded)
                const((Cmid_p, 9 * Cmid_p)), const((Cmid_p, 1)),       # conv2, stacked taps
                const((Cin, Cmid_p)), const((Cin, 1)),                 # conv3 (BN folded)
                const((9, HW)),                                        # boundary masks
            ],
            out_specs=pl.BlockSpec((bt, Cin, HW), lambda i: (i, 0, 0)),
            compiler_params=pltpu.CompilerParams(
                dimension_semantics=("parallel",),
                vmem_limit_bytes=int(vmem_limit),
            ),
        )

    args = (x_in, w1p, b1p, w2s, b2p, w3p, b3p, tap_mask)
    try:
        # Preferred: constants single-buffered (saves VMEM on v7x for realistic Cmid).
        out = build(True)(*args)
    except Exception:
        # Fallback if this JAX/Mosaic build rejects pipeline_mode=Buffered(1).
        out = build(False)(*args)

    return out.reshape(B, Cin, H, W).astype(x.dtype)


def bottleneck_identity_psp_reference(x, params, eps=_BN_EPS):
    """Pure-JAX reference mirroring the PyTorch module (eval-mode BN)."""
    def bn(y, g, be, m, v):
        inv = 1.0 / jnp.sqrt(v + eps)
        return (y - m[None, :, None, None]) * (g * inv)[None, :, None, None] + be[None, :, None, None]

    h = jnp.einsum("oi,bihw->bohw", params["w1"], x)
    h = jax.nn.relu(bn(h, params["g1"], params["be1"], params["m1"], params["v1"]))
    h = jax.lax.conv_general_dilated(
        h, params["w2"], window_strides=(1, 1), padding=((1, 1), (1, 1)),
        dimension_numbers=("NCHW", "OIHW", "NCHW"))
    h = jax.nn.relu(bn(h, params["g2"], params["be2"], params["m2"], params["v2"]))
    h = jnp.einsum("om,bmhw->bohw", params["w3"], h)
    h = bn(h, params["g3"], params["be3"], params["m3"], params["v3"])
    return jax.nn.relu(h + x)


if __name__ == "__main__":
    B, Cin, Cmid, H, W = 2, 8, 4, 16, 16     # in_channels=8, mid_channels=4, 16x16 spatial

    key = jax.random.PRNGKey(0)
    keys = jax.random.split(key, 16)

    x = jax.random.normal(keys[0], (B, Cin, H, W), dtype=jnp.float32)

    def bn_params(kg, kb, km, kv, c):
        return (1.0 + 0.1 * jax.random.normal(kg, (c,), jnp.float32),
                0.1 * jax.random.normal(kb, (c,), jnp.float32),
                0.1 * jax.random.normal(km, (c,), jnp.float32),
                jax.random.uniform(kv, (c,), jnp.float32, minval=0.5, maxval=1.5))

    g1, be1, m1, v1 = bn_params(keys[1], keys[2], keys[3], keys[4], Cmid)
    g2, be2, m2, v2 = bn_params(keys[5], keys[6], keys[7], keys[8], Cmid)
    g3, be3, m3, v3 = bn_params(keys[9], keys[10], keys[11], keys[12], Cin)

    params = {
        "w1": 0.3 * jax.random.normal(keys[13], (Cmid, Cin), jnp.float32),        # cbr1 1x1: in->mid
        "w2": 0.3 * jax.random.normal(keys[14], (Cmid, Cmid, 3, 3), jnp.float32), # cbr2 3x3: mid->mid
        "w3": 0.3 * jax.random.normal(keys[15], (Cin, Cmid), jnp.float32),        # cb3  1x1: mid->in
        "g1": g1, "be1": be1, "m1": m1, "v1": v1,
        "g2": g2, "be2": be2, "m2": m2, "v2": v2,
        "g3": g3, "be3": be3, "m3": m3, "v3": v3,
    }

    out = bottleneck_identity_psp_pallas(x, params)
    out = jax.block_until_ready(out)

    ref = bottleneck_identity_psp_reference(x, params)
    assert out.shape == (B, Cin, H, W)
    assert jnp.allclose(out, ref, atol=1e-4, rtol=1e-4), float(jnp.max(jnp.abs(out - ref)))

    print("KERNEL_OK")
</pallas_src>

<mosaic_0001>
module attributes {stable_mosaic.version = 11 : i64} {
  func.func @_bottleneck_kernel(%arg0: i32, %arg1: memref<1x8x256xf32, #tpu.memory_space<vmem>>, %arg2: memref<8x8xf32, #tpu.memory_space<vmem>>, %arg3: memref<8x1xf32, #tpu.memory_space<vmem>>, %arg4: memref<8x72xf32, #tpu.memory_space<vmem>>, %arg5: memref<8x1xf32, #tpu.memory_space<vmem>>, %arg6: memref<8x8xf32, #tpu.memory_space<vmem>>, %arg7: memref<8x1xf32, #tpu.memory_space<vmem>>, %arg8: memref<9x256xf32, #tpu.memory_space<vmem>>, %arg9: memref<1x8x256xf32, #tpu.memory_space<vmem>>) attributes {dimension_semantics = [#tpu.dimension_semantics<parallel>], iteration_bounds = array<i64: 2>, scalar_prefetch = 0 : i64, scratch_operands = 0 : i64, tpu.core_type = #tpu.core_type<tc>, window_params = [{transform_indices = @transform_0, window_bounds = array<i64: 1, 8, 256>}, {pipeline_mode = #tpu.pipeline_mode<synchronous>, transform_indices = @transform_1, window_bounds = array<i64: 8, 8>}, {pipeline_mode = #tpu.pipeline_mode<synchronous>, transform_indices = @transform_2, window_bounds = array<i64: 8, 1>}, {pipeline_mode = #tpu.pipeline_mode<synchronous>, transform_indices = @transform_3, window_bounds = array<i64: 8, 72>}, {pipeline_mode = #tpu.pipeline_mode<synchronous>, transform_indices = @transform_4, window_bounds = array<i64: 8, 1>}, {pipeline_mode = #tpu.pipeline_mode<synchronous>, transform_indices = @transform_5, window_bounds = array<i64: 8, 8>}, {pipeline_mode = #tpu.pipeline_mode<synchronous>, transform_indices = @transform_6, window_bounds = array<i64: 8, 1>}, {pipeline_mode = #tpu.pipeline_mode<synchronous>, transform_indices = @transform_7, window_bounds = array<i64: 9, 256>}, {transform_indices = @transform_8, window_bounds = array<i64: 1, 8, 256>}]} {
    %c0 = arith.constant 0 : index
    %c0_0 = arith.constant 0 : index
    %c0_1 = arith.constant 0 : index
    %0 = vector.load %arg1[%c0, %c0_0, %c0_1] : memref<1x8x256xf32, #tpu.memory_space<vmem>>, vector<1x8x256xf32>
    %1 = vector.shape_cast %0 : vector<1x8x256xf32> to vector<8x256xf32>
    %c0_2 = arith.constant 0 : index
    %c0_3 = arith.constant 0 : index
    %2 = vector.load %arg2[%c0_2, %c0_3] : memref<8x8xf32, #tpu.memory_space<vmem>>, vector<8x8xf32>
    %cst = arith.constant dense<0.000000e+00> : vector<8x256xf32>
    %3 = tpu.matmul %2, %1, %cst {dimension_numbers = #tpu.dot_dimension_numbers<[1], [0], [0], [1], [0, 0, 1, 1], [], []>} : vector<8x8xf32>, vector<8x256xf32>, vector<8x256xf32> -> vector<8x256xf32>
    %c0_4 = arith.constant 0 : index
    %c0_5 = arith.constant 0 : index
    %4 = vector.load %arg3[%c0_4, %c0_5] : memref<8x1xf32, #tpu.memory_space<vmem>>, vector<8x1xf32>
    %5 = vector.broadcast %4 : vector<8x1xf32> to vector<8x256xf32>
    %6 = arith.addf %3, %5 : vector<8x256xf32>
    %cst_6 = arith.constant 0.000000e+00 : f32
    %7 = vector.broadcast %cst_6 : f32 to vector<8x256xf32>
    %8 = arith.maximumf %6, %7 : vector<8x256xf32>
    %c17_i32 = arith.constant 17 : i32
    %9 = tpu.dynamic_rotate %8 by %c17_i32 dim 1 : vector<8x256xf32>, i32 -> vector<8x256xf32>
    %c0_7 = arith.constant 0 : index
    %c0_8 = arith.constant 0 : index
    %10 = vector.load %arg8[%c0_7, %c0_8] : memref<9x256xf32, #tpu.memory_space<vmem>>, vector<1x256xf32>
    %11 = vector.broadcast %10 : vector<1x256xf32> to vector<8x256xf32>
    %12 = arith.mulf %9, %11 : vector<8x256xf32>
    %c16_i32 = arith.constant 16 : i32
    %13 = tpu.dynamic_rotate %8 by %c16_i32 dim 1 : vector<8x256xf32>, i32 -> vector<8x256xf32>
    %c1 = arith.constant 1 : index
    %c0_9 = arith.constant 0 : index
    %14 = vector.load %arg8[%c1, %c0_9] : memref<9x256xf32, #tpu.memory_space<vmem>>, vector<1x256xf32>
    %15 = vector.broadcast %14 : vector<1x256xf32> to vector<8x256xf32>
    %16 = arith.mulf %13, %15 : vector<8x256xf32>
    %c15_i32 = arith.constant 15 : i32
    %17 = tpu.dynamic_rotate %8 by %c15_i32 dim 1 : vector<8x256xf32>, i32 -> vector<8x256xf32>
    %c2 = arith.constant 2 : index
    %c0_10 = arith.constant 0 : index
    %18 = vector.load %arg8[%c2, %c0_10] : memref<9x256xf32, #tpu.memory_space<vmem>>, vector<1x256xf32>
    %19 = vector.broadcast %18 : vector<1x256xf32> to vector<8x256xf32>
    %20 = arith.mulf %17, %19 : vector<8x256xf32>
    %c1_i32 = arith.constant 1 : i32
    %21 = tpu.dynamic_rotate %8 by %c1_i32 dim 1 : vector<8x256xf32>, i32 -> vector<8x256xf32>
    %c3 = arith.constant 3 : index
    %c0_11 = arith.constant 0 : index
    %22 = vector.load %arg8[%c3, %c0_11] : memref<9x256xf32, #tpu.memory_space<vmem>>, vector<1x256xf32>
    %23 = vector.broadcast %22 : vector<1x256xf32> to vector<8x256xf32>
    %24 = arith.mulf %21, %23 : vector<8x256xf32>
    %c255_i32 = arith.constant 255 : i32
    %25 = tpu.dynamic_rotate %8 by %c255_i32 dim 1 : vector<8x256xf32>, i32 -> vector<8x256xf32>
    %c5 = arith.constant 5 : index
    %c0_12 = arith.constant 0 : index
    %26 = vector.load %arg8[%c5, %c0_12] : memref<9x256xf32, #tpu.memory_space<vmem>>, vector<1x256xf32>
    %27 = vector.broadcast %26 : vector<1x256xf32> to vector<8x256xf32>
    %28 = arith.mulf %25, %27 : vector<8x256xf32>
    %c241_i32 = arith.constant 241 : i32
    %29 = tpu.dynamic_rotate %8 by %c241_i32 dim 1 : vector<8x256xf32>, i32 -> vector<8x256xf32>
    %c6 = arith.constant 6 : index
    %c0_13 = arith.constant 0 : index
    %30 = vector.load %arg8[%c6, %c0_13] : memref<9x256xf32, #tpu.memory_space<vmem>>, vector<1x256xf32>
    %31 = vector.broadcast %30 : vector<1x256xf32> to vector<8x256xf32>
    %32 = arith.mulf %29, %31 : vector<8x256xf32>
    %c240_i32 = arith.constant 240 : i32
    %33 = tpu.dynamic_rotate %8 by %c240_i32 dim 1 : vector<8x256xf32>, i32 -> vector<8x256xf32>
    %c7 = arith.constant 7 : index
    %c0_14 = arith.constant 0 : index
    %34 = vector.load %arg8[%c7, %c0_14] : memref<9x256xf32, #tpu.memory_space<vmem>>, vector<1x256xf32>
    %35 = vector.broadcast %34 : vector<1x256xf32> to vector<8x256xf32>
    %36 = arith.mulf %33, %35 : vector<8x256xf32>
    %c239_i32 = arith.constant 239 : i32
    %37 = tpu.dynamic_rotate %8 by %c239_i32 dim 1 : vector<8x256xf32>, i32 -> vector<8x256xf32>
    %c8 = arith.constant 8 : index
    %c0_15 = arith.constant 0 : index
    %38 = vector.load %arg8[%c8, %c0_15] : memref<9x256xf32, #tpu.memory_space<vmem>>, vector<1x256xf32>
    %39 = vector.broadcast %38 : vector<1x256xf32> to vector<8x256xf32>
    %40 = arith.mulf %37, %39 : vector<8x256xf32>
    %41 = tpu.concatenate %12, %16, %20, %24, %8, %28, %32, %36, %40 in 0 : vector<8x256xf32>, vector<8x256xf32>, vector<8x256xf32>, vector<8x256xf32>, vector<8x256xf32>, vector<8x256xf32>, vector<8x256xf32>, vector<8x256xf32>, vector<8x256xf32> -> vector<72x256xf32>
    %c0_16 = arith.constant 0 : index
    %c0_17 = arith.constant 0 : index
    %42 = vector.load %arg4[%c0_16, %c0_17] : memref<8x72xf32, #tpu.memory_space<vmem>>, vector<8x72xf32>
    %cst_18 = arith.constant dense<0.000000e+00> : vector<8x256xf32>
    %43 = tpu.matmul %42, %41, %cst_18 {dimension_numbers = #tpu.dot_dimension_numbers<[1], [0], [0], [1], [0, 0, 1, 1], [], []>} : vector<8x72xf32>, vector<72x256xf32>, vector<8x256xf32> -> vector<8x256xf32>
    %c0_19 = arith.constant 0 : index
    %c0_20 = arith.constant 0 : index
    %44 = vector.load %arg5[%c0_19, %c0_20] : memref<8x1xf32, #tpu.memory_space<vmem>>, vector<8x1xf32>
    %45 = vector.broadcast %44 : vector<8x1xf32> to vector<8x256xf32>
    %46 = arith.addf %43, %45 : vector<8x256xf32>
    %cst_21 = arith.constant 0.000000e+00 : f32
    %47 = vector.broadcast %cst_21 : f32 to vector<8x256xf32>
    %48 = arith.maximumf %46, %47 : vector<8x256xf32>
    %c0_22 = arith.constant 0 : index
    %c0_23 = arith.constant 0 : index
    %49 = vector.load %arg6[%c0_22, %c0_23] : memref<8x8xf32, #tpu.memory_space<vmem>>, vector<8x8xf32>
    %cst_24 = arith.constant dense<0.000000e+00> : vector<8x256xf32>
    %50 = tpu.matmul %49, %48, %cst_24 {dimension_numbers = #tpu.dot_dimension_numbers<[1], [0], [0], [1], [0, 0, 1, 1], [], []>} : vector<8x8xf32>, vector<8x256xf32>, vector<8x256xf32> -> vector<8x256xf32>
    %c0_25 = arith.constant 0 : index
    %c0_26 = arith.constant 0 : index
    %51 = vector.load %arg7[%c0_25, %c0_26] : memref<8x1xf32, #tpu.memory_space<vmem>>, vector<8x1xf32>
    %52 = vector.broadcast %51 : vector<8x1xf32> to vector<8x256xf32>
    %53 = arith.addf %50, %52 : vector<8x256xf32>
    %c0_27 = arith.constant 0 : index
    %c0_28 = arith.constant 0 : index
    %c0_29 = arith.constant 0 : index
    %54 = vector.load %arg1[%c0_27, %c0_28, %c0_29] : memref<1x8x256xf32, #tpu.memory_space<vmem>>, vector<1x8x256xf32>
    %55 = vector.shape_cast %54 : vector<1x8x256xf32> to vector<8x256xf32>
    %56 = arith.addf %53, %55 : vector<8x256xf32>
    %cst_30 = arith.constant 0.000000e+00 : f32
    %57 = vector.broadcast %cst_30 : f32 to vector<8x256xf32>
    %58 = arith.maximumf %56, %57 : vector<8x256xf32>
    %c0_31 = arith.constant 0 : index
    %c0_32 = arith.constant 0 : index
    %c0_33 = arith.constant 0 : index
    %59 = vector.load %arg9[%c0_31, %c0_32, %c0_33] : memref<1x8x256xf32, #tpu.memory_space<vmem>>, vector<1x8x256xf32>
    %60 = vector.shape_cast %59 : vector<1x8x256xf32> to vector<8x256xf32>
    %61 = vector.shape_cast %58 : vector<8x256xf32> to vector<1x8x256xf32>
    tpu.vector_store %arg9[%c0_31, %c0_32, %c0_33], %61 {strides = array<i32>} : memref<1x8x256xf32, #tpu.memory_space<vmem>>, vector<1x8x256xf32>,
    return
  }
  func.func @transform_0(%arg0: i32) -> (i32, i32, i32) {
    %c0_i32 = arith.constant 0 : i32
    %c0_i32_0 = arith.constant 0 : i32
    %c0_i32_1 = arith.constant 0 : i32
    return %arg0, %c0_i32, %c0_i32_0 : i32, i32, i32
  }
  func.func @transform_1(%arg0: i32) -> (i32, i32) {
    %c0_i32 = arith.constant 0 : i32
    %c0_i32_0 = arith.constant 0 : i32
    %c0_i32_1 = arith.constant 0 : i32
    return %c0_i32, %c0_i32_0 : i32, i32
  }
  func.func @transform_2(%arg0: i32) -> (i32, i32) {
    %c0_i32 = arith.constant 0 : i32
    %c0_i32_0 = arith.constant 0 : i32
    %c0_i32_1 = arith.constant 0 : i32
    return %c0_i32, %c0_i32_0 : i32, i32
  }
  func.func @transform_3(%arg0: i32) -> (i32, i32) {
    %c0_i32 = arith.constant 0 : i32
    %c0_i32_0 = arith.constant 0 : i32
    %c0_i32_1 = arith.constant 0 : i32
    return %c0_i32, %c0_i32_0 : i32, i32
  }
  func.func @transform_4(%arg0: i32) -> (i32, i32) {
    %c0_i32 = arith.constant 0 : i32
    %c0_i32_0 = arith.constant 0 : i32
    %c0_i32_1 = arith.constant 0 : i32
    return %c0_i32, %c0_i32_0 : i32, i32
  }
  func.func @transform_5(%arg0: i32) -> (i32, i32) {
    %c0_i32 = arith.constant 0 : i32
    %c0_i32_0 = arith.constant 0 : i32
    %c0_i32_1 = arith.constant 0 : i32
    return %c0_i32, %c0_i32_0 : i32, i32
  }
  func.func @transform_6(%arg0: i32) -> (i32, i32) {
    %c0_i32 = arith.constant 0 : i32
    %c0_i32_0 = arith.constant 0 : i32
    %c0_i32_1 = arith.constant 0 : i32
    return %c0_i32, %c0_i32_0 : i32, i32
  }
  func.func @transform_7(%arg0: i32) -> (i32, i32) {
    %c0_i32 = arith.constant 0 : i32
    %c0_i32_0 = arith.constant 0 : i32
    %c0_i32_1 = arith.constant 0 : i32
    return %c0_i32, %c0_i32_0 : i32, i32
  }
  func.func @transform_8(%arg0: i32) -> (i32, i32, i32) {
    %c0_i32 = arith.constant 0 : i32
    %c0_i32_0 = arith.constant 0 : i32
    %c0_i32_1 = arith.constant 0 : i32
    return %arg0, %c0_i32, %c0_i32_0 : i32, i32, i32
  }
}

module attributes {stable_mosaic.version = 11 : i64} {
  func.func @_bottleneck_kernel(%arg0: i32, %arg1: memref<1x8x256xf32, #tpu.memory_space<vmem>>, %arg2: memref<8x8xf32, #tpu.memory_space<vmem>>, %arg3: memref<8x1xf32, #tpu.memory_space<vmem>>, %arg4: memref<8x72xf32, #tpu.memory_space<vmem>>, %arg5: memref<8x1xf32, #tpu.memory_space<vmem>>, %arg6: memref<8x8xf32, #tpu.memory_space<vmem>>, %arg7: memref<8x1xf32, #tpu.memory_space<vmem>>, %arg8: memref<9x256xf32, #tpu.memory_space<vmem>>, %arg9: memref<1x8x256xf32, #tpu.memory_space<vmem>>) attributes {dimension_semantics = [#tpu.dimension_semantics<parallel>], iteration_bounds = array<i64: 2>, scalar_prefetch = 0 : i64, scratch_operands = 0 : i64, tpu.core_type = #tpu.core_type<tc>, window_params = [{transform_indices = @transform_0, window_bounds = array<i64: 1, 8, 256>}, {pipeline_mode = #tpu.pipeline_mode<synchronous>, transform_indices = @transform_1, window_bounds = array<i64: 8, 8>}, {pipeline_mode = #tpu.pipeline_mode<synchronous>, transform_indices = @transform_2, window_bounds = array<i64: 8, 1>}, {pipeline_mode = #tpu.pipeline_mode<synchronous>, transform_indices = @transform_3, window_bounds = array<i64: 8, 72>}, {pipeline_mode = #tpu.pipeline_mode<synchronous>, transform_indices = @transform_4, window_bounds = array<i64: 8, 1>}, {pipeline_mode = #tpu.pipeline_mode<synchronous>, transform_indices = @transform_5, window_bounds = array<i64: 8, 8>}, {pipeline_mode = #tpu.pipeline_mode<synchronous>, transform_indices = @transform_6, window_bounds = array<i64: 8, 1>}, {pipeline_mode = #tpu.pipeline_mode<synchronous>, transform_indices = @transform_7, window_bounds = array<i64: 9, 256>}, {transform_indices = @transform_8, window_bounds = array<i64: 1, 8, 256>}]} {
    %c0 = arith.constant 0 : index
    %c0_0 = arith.constant 0 : index
    %c0_1 = arith.constant 0 : index
    %0 = vector.load %arg1[%c0, %c0_0, %c0_1] : memref<1x8x256xf32, #tpu.memory_space<vmem>>, vector<1x8x256xf32>
    %1 = vector.shape_cast %0 : vector<1x8x256xf32> to vector<8x256xf32>
    %c0_2 = arith.constant 0 : index
    %c0_3 = arith.constant 0 : index
    %2 = vector.load %arg2[%c0_2, %c0_3] : memref<8x8xf32, #tpu.memory_space<vmem>>, vector<8x8xf32>
    %cst = arith.constant dense<0.000000e+00> : vector<8x256xf32>
    %3 = tpu.matmul %2, %1, %cst {dimension_numbers = #tpu.dot_dimension_numbers<[1], [0], [0], [1], [0, 0, 1, 1], [], []>} : vector<8x8xf32>, vector<8x256xf32>, vector<8x256xf32> -> vector<8x256xf32>
    %c0_4 = arith.constant 0 : index
    %c0_5 = arith.constant 0 : index
    %4 = vector.load %arg3[%c0_4, %c0_5] : memref<8x1xf32, #tpu.memory_space<vmem>>, vector<8x1xf32>
    %5 = vector.broadcast %4 : vector<8x1xf32> to vector<8x256xf32>
    %6 = arith.addf %3, %5 : vector<8x256xf32>
    %cst_6 = arith.constant 0.000000e+00 : f32
    %7 = vector.broadcast %cst_6 : f32 to vector<8x256xf32>
    %8 = arith.maximumf %6, %7 : vector<8x256xf32>
    %c17_i32 = arith.constant 17 : i32
    %9 = tpu.dynamic_rotate %8 by %c17_i32 dim 1 : vector<8x256xf32>, i32 -> vector<8x256xf32>
    %c0_7 = arith.constant 0 : index
    %c0_8 = arith.constant 0 : index
    %10 = vector.load %arg8[%c0_7, %c0_8] : memref<9x256xf32, #tpu.memory_space<vmem>>, vector<1x256xf32>
    %11 = vector.broadcast %10 : vector<1x256xf32> to vector<8x256xf32>
    %12 = arith.mulf %9, %11 : vector<8x256xf32>
    %c16_i32 = arith.constant 16 : i32
    %13 = tpu.dynamic_rotate %8 by %c16_i32 dim 1 : vector<8x256xf32>, i32 -> vector<8x256xf32>
    %c1 = arith.constant 1 : index
    %c0_9 = arith.constant 0 : index
    %14 = vector.load %arg8[%c1, %c0_9] : memref<9x256xf32, #tpu.memory_space<vmem>>, vector<1x256xf32>
    %15 = vector.broadcast %14 : vector<1x256xf32> to vector<8x256xf32>
    %16 = arith.mulf %13, %15 : vector<8x256xf32>
    %c15_i32 = arith.constant 15 : i32
    %17 = tpu.dynamic_rotate %8 by %c15_i32 dim 1 : vector<8x256xf32>, i32 -> vector<8x256xf32>
    %c2 = arith.constant 2 : index
    %c0_10 = arith.constant 0 : index
    %18 = vector.load %arg8[%c2, %c0_10] : memref<9x256xf32, #tpu.memory_space<vmem>>, vector<1x256xf32>
    %19 = vector.broadcast %18 : vector<1x256xf32> to vector<8x256xf32>
    %20 = arith.mulf %17, %19 : vector<8x256xf32>
    %c1_i32 = arith.constant 1 : i32
    %21 = tpu.dynamic_rotate %8 by %c1_i32 dim 1 : vector<8x256xf32>, i32 -> vector<8x256xf32>
    %c3 = arith.constant 3 : index
    %c0_11 = arith.constant 0 : index
    %22 = vector.load %arg8[%c3, %c0_11] : memref<9x256xf32, #tpu.memory_space<vmem>>, vector<1x256xf32>
    %23 = vector.broadcast %22 : vector<1x256xf32> to vector<8x256xf32>
    %24 = arith.mulf %21, %23 : vector<8x256xf32>
    %c255_i32 = arith.constant 255 : i32
    %25 = tpu.dynamic_rotate %8 by %c255_i32 dim 1 : vector<8x256xf32>, i32 -> vector<8x256xf32>
    %c5 = arith.constant 5 : index
    %c0_12 = arith.constant 0 : index
    %26 = vector.load %arg8[%c5, %c0_12] : memref<9x256xf32, #tpu.memory_space<vmem>>, vector<1x256xf32>
    %27 = vector.broadcast %26 : vector<1x256xf32> to vector<8x256xf32>
    %28 = arith.mulf %25, %27 : vector<8x256xf32>
    %c241_i32 = arith.constant 241 : i32
    %29 = tpu.dynamic_rotate %8 by %c241_i32 dim 1 : vector<8x256xf32>, i32 -> vector<8x256xf32>
    %c6 = arith.constant 6 : index
    %c0_13 = arith.constant 0 : index
    %30 = vector.load %arg8[%c6, %c0_13] : memref<9x256xf32, #tpu.memory_space<vmem>>, vector<1x256xf32>
    %31 = vector.broadcast %30 : vector<1x256xf32> to vector<8x256xf32>
    %32 = arith.mulf %29, %31 : vector<8x256xf32>
    %c240_i32 = arith.constant 240 : i32
    %33 = tpu.dynamic_rotate %8 by %c240_i32 dim 1 : vector<8x256xf32>, i32 -> vector<8x256xf32>
    %c7 = arith.constant 7 : index
    %c0_14 = arith.constant 0 : index
    %34 = vector.load %arg8[%c7, %c0_14] : memref<9x256xf32, #tpu.memory_space<vmem>>, vector<1x256xf32>
    %35 = vector.broadcast %34 : vector<1x256xf32> to vector<8x256xf32>
    %36 = arith.mulf %33, %35 : vector<8x256xf32>
    %c239_i32 = arith.constant 239 : i32
    %37 = tpu.dynamic_rotate %8 by %c239_i32 dim 1 : vector<8x256xf32>, i32 -> vector<8x256xf32>
    %c8 = arith.constant 8 : index
    %c0_15 = arith.constant 0 : index
    %38 = vector.load %arg8[%c8, %c0_15] : memref<9x256xf32, #tpu.memory_space<vmem>>, vector<1x256xf32>
    %39 = vector.broadcast %38 : vector<1x256xf32> to vector<8x256xf32>
    %40 = arith.mulf %37, %39 : vector<8x256xf32>
    %41 = tpu.concatenate %12, %16, %20, %24, %8, %28, %32, %36, %40 in 0 : vector<8x256xf32>, vector<8x256xf32>, vector<8x256xf32>, vector<8x256xf32>, vector<8x256xf32>, vector<8x256xf32>, vector<8x256xf32>, vector<8x256xf32>, vector<8x256xf32> -> vector<72x256xf32>
    %c0_16 = arith.constant 0 : index
    %c0_17 = arith.constant 0 : index
    %42 = vector.load %arg4[%c0_16, %c0_17] : memref<8x72xf32, #tpu.memory_space<vmem>>, vector<8x72xf32>
    %cst_18 = arith.constant dense<0.000000e+00> : vector<8x256xf32>
    %43 = tpu.matmul %42, %41, %cst_18 {dimension_numbers = #tpu.dot_dimension_numbers<[1], [0], [0], [1], [0, 0, 1, 1], [], []>} : vector<8x72xf32>, vector<72x256xf32>, vector<8x256xf32> -> vector<8x256xf32>
    %c0_19 = arith.constant 0 : index
    %c0_20 = arith.constant 0 : index
    %44 = vector.load %arg5[%c0_19, %c0_20] : memref<8x1xf32, #tpu.memory_space<vmem>>, vector<8x1xf32>
    %45 = vector.broadcast %44 : vector<8x1xf32> to vector<8x256xf32>
    %46 = arith.addf %43, %45 : vector<8x256xf32>
    %cst_21 = arith.constant 0.000000e+00 : f32
    %47 = vector.broadcast %cst_21 : f32 to vector<8x256xf32>
    %48 = arith.maximumf %46, %47 : vector<8x256xf32>
    %c0_22 = arith.constant 0 : index
    %c0_23 = arith.constant 0 : index
    %49 = vector.load %arg6[%c0_22, %c0_23] : memref<8x8xf32, #tpu.memory_space<vmem>>, vector<8x8xf32>
    %cst_24 = arith.constant dense<0.000000e+00> : vector<8x256xf32>
    %50 = tpu.matmul %49, %48, %cst_24 {dimension_numbers = #tpu.dot_dimension_numbers<[1], [0], [0], [1], [0, 0, 1, 1], [], []>} : vector<8x8xf32>, vector<8x256xf32>, vector<8x256xf32> -> vector<8x256xf32>
    %c0_25 = arith.constant 0 : index
    %c0_26 = arith.constant 0 : index
    %51 = vector.load %arg7[%c0_25, %c0_26] : memref<8x1xf32, #tpu.memory_space<vmem>>, vector<8x1xf32>
    %52 = vector.broadcast %51 : vector<8x1xf32> to vector<8x256xf32>
    %53 = arith.addf %50, %52 : vector<8x256xf32>
    %c0_27 = arith.constant 0 : index
    %c0_28 = arith.constant 0 : index
    %c0_29 = arith.constant 0 : index
    %54 = vector.load %arg1[%c0_27, %c0_28, %c0_29] : memref<1x8x256xf32, #tpu.memory_space<vmem>>, vector<1x8x256xf32>
    %55 = vector.shape_cast %54 : vector<1x8x256xf32> to vector<8x256xf32>
    %56 = arith.addf %53, %55 : vector<8x256xf32>
    %cst_30 = arith.constant 0.000000e+00 : f32
    %57 = vector.broadcast %cst_30 : f32 to vector<8x256xf32>
    %58 = arith.maximumf %56, %57 : vector<8x256xf32>
    %c0_31 = arith.constant 0 : index
    %c0_32 = arith.constant 0 : index
    %c0_33 = arith.constant 0 : index
    %59 = vector.load %arg9[%c0_31, %c0_32, %c0_33] : memref<1x8x256xf32, #tpu.memory_space<vmem>>, vector<1x8x256xf32>
    %60 = vector.shape_cast %59 : vector<1x8x256xf32> to vector<8x256xf32>
    %61 = vector.shape_cast %58 : vector<8x256xf32> to vector<1x8x256xf32>
    tpu.vector_store %arg9[%c0_31, %c0_32, %c0_33], %61 {strides = array<i32>} : memref<1x8x256xf32, #tpu.memory_space<vmem>>, vector<1x8x256xf32>,
    return
  }
  func.func @transform_0(%arg0: i32) -> (i32, i32, i32) {
    %c0_i32 = arith.constant 0 : i32
    %c0_i32_0 = arith.constant 0 : i32
    %c0_i32_1 = arith.constant 0 : i32
    return %arg0, %c0_i32, %c0_i32_0 : i32, i32, i32
  }
  func.func @transform_1(%arg0: i32) -> (i32, i32) {
    %c0_i32 = arith.constant 0 : i32
    %c0_i32_0 = arith.constant 0 : i32
    %c0_i32_1 = arith.constant 0 : i32
    return %c0_i32, %c0_i32_0 : i32, i32
  }
  func.func @transform_2(%arg0: i32) -> (i32, i32) {
    %c0_i32 = arith.constant 0 : i32
    %c0_i32_0 = arith.constant 0 : i32
    %c0_i32_1 = arith.constant 0 : i32
    return %c0_i32, %c0_i32_0 : i32, i32
  }
  func.func @transform_3(%arg0: i32) -> (i32, i32) {
    %c0_i32 = arith.constant 0 : i32
    %c0_i32_0 = arith.constant 0 : i32
    %c0_i32_1 = arith.constant 0 : i32
    return %c0_i32, %c0_i32_0 : i32, i32
  }
  func.func @transform_4(%arg0: i32) -> (i32, i32) {
    %c0_i32 = arith.constant 0 : i32
    %c0_i32_0 = arith.constant 0 : i32
    %c0_i32_1 = arith.constant 0 : i32
    return %c0_i32, %c0_i32_0 : i32, i32
  }
  func.func @transform_5(%arg0: i32) -> (i32, i32) {
    %c0_i32 = arith.constant 0 : i32
    %c0_i32_0 = arith.constant 0 : i32
    %c0_i32_1 = arith.constant 0 : i32
    return %c0_i32, %c0_i32_0 : i32, i32
  }
  func.func @transform_6(%arg0: i32) -> (i32, i32) {
    %c0_i32 = arith.constant 0 : i32
    %c0_i32_0 = arith.constant 0 : i32
    %c0_i32_1 = arith.constant 0 : i32
    return %c0_i32, %c0_i32_0 : i32, i32
  }
  func.func @transform_7(%arg0: i32) -> (i32, i32) {
    %c0_i32 = arith.constant 0 : i32
    %c0_i32_0 = arith.constant 0 : i32
    %c0_i32_1 = arith.constant 0 : i32
    return %c0_i32, %c0_i32_0 : i32, i32
  }
  func.func @transform_8(%arg0: i32) -> (i32, i32, i32) {
    %c0_i32 = arith.constant 0 : i32
    %c0_i32_0 = arith.constant 0 : i32
    %c0_i32_1 = arith.constant 0 : i32
    return %arg0, %c0_i32, %c0_i32_0 : i32, i32, i32
  }
}

</mosaic_0001>

<llo_original>
// kernel: tpu_custom_call.1
$region0: #{tpu_custom_call.1}
  #allocation0 [shape = 'u32[]', space=smem, size = 0x4, offset = 0x4, fixed_abs, tag = 'smem constant byte address 0x4 - core index']
  #allocation1 [shape = 'u32[144,128]{1,0:T(1,128)}', space=vmem, size = 0x12000, scoped, tag = 'internal scratch']
  %s0 = inlined_call_operand.hbm [shape: f32[2,8,256], index: 0, kind: input, shape index: {}]
  %s1 = inlined_call_operand.vmem [shape: f32[8,8], index: 1, kind: input, shape index: {}]
  %s2 = inlined_call_operand.vmem [shape: f32[8,1], index: 2, kind: input, shape index: {}]
  %s3 = inlined_call_operand.vmem [shape: f32[8,72], index: 3, kind: input, shape index: {}]
  %s4 = inlined_call_operand.vmem [shape: f32[8,1], index: 4, kind: input, shape index: {}]
  %s5 = inlined_call_operand.hbm [shape: f32[8,8], index: 5, kind: input, shape index: {}]
  %s6 = inlined_call_operand.vmem [shape: f32[8,1], index: 6, kind: input, shape index: {}]
  %s7 = inlined_call_operand.vmem [shape: f32[9,256], index: 7, kind: input, shape index: {}]
  %s8 = inlined_call_operand.hbm [shape: f32[2,8,256], index: 8, kind: output, shape index: {}]
  %s9 = sld [smem:[#allocation0]]
  $region73: #{tpu_custom_call.1} parent=0
    _
  %s11 = ssub.s32 1, %s9
  %s12 = scalar_select 0, %s11, %s9
  $region1: #{tpu_custom_call.1} parent=0
    #allocation2 [shape = 'u8[16384]{0}', space=vmem, size = 0x4000, scoped, tag = 'input window, operand 0']
    #allocation3 [shape = 's32[2]{0}', space=sflag, size = 0x8, scoped, tag = 'scoped memory for tpu_custom_call.1']
    #allocation4 [shape = 's32[2]{0}', space=sflag, size = 0x8, scoped, tag = 'scoped memory for tpu_custom_call.1']
    #allocation5 [shape = 'u8[4096]{0}', space=vmem, size = 0x1000, scoped, tag = 'input window, operand 5, single buffered']
    #allocation6 [shape = 's32[1]{0}', space=sflag, size = 0x4, scoped, tag = 'scoped memory for tpu_custom_call.1']
    #allocation7 [shape = 'u8[16384]{0}', space=vmem, size = 0x4000, scoped, tag = 'output window, operand 0']
    %13 = vsyncpa [#allocation3], 0
    %s14 = scalar_lea.sflag [#allocation3], 1
    %15 = vsyncpa %s14, 0
    %16 = vsyncpa [#allocation6], 0
    %17 = vsyncpa [#allocation4], 0
    %s18 = scalar_lea.sflag [#allocation4], 1
    %19 = vsyncpa %s18, 0
    loop: start=0, step=1, limit=4
    $region2: #{tpu_custom_call.1} parent=1 // loop_pre_header
      _
    $region3: #{tpu_custom_call.1} parent=1 // loop_header
      %s21 = sphi 0, %s25
      %p22 = scmp.ge.s32.totalorder %s21, 4
      %s31 = sphi 0, %s33
      %s34 = sphi 0, %s31
      %s35 = sphi 0, %s34
      %s51 = sphi 0, %s35
      %s55 = sphi 0, %s55
      %s57 = sphi 0, %s55
      %s58 = sphi 0, %s57
      %s72 = sphi 0, %s58
      %s76 = sphi 0, %s76
      %s78 = sphi 0, %s76
      %s79 = sphi 0, %s78
      %s93 = sphi 0, %s79
      %s97 = sphi 0, %s97
      %s99 = sphi 0, %s97
      %s100 = sphi 0, %s99
      %s114 = sphi 0, %s100
      %s118 = sphi 0, %s118
      %s120 = sphi 0, %s118
      %s121 = sphi 0, %s120
      %s135 = sphi 0, %s121
      %s139 = sphi 0, %s139
      %s141 = sphi 0, %s139
      %s142 = sphi 0, %s141
      %s156 = sphi 0, %s142
      %s160 = sphi 0, %s160
      %s162 = sphi 0, %s160
      %s163 = sphi 0, %s162
      %s177 = sphi 0, %s163
      %s181 = sphi 0, %s181
      %s183 = sphi 0, %s181
      %s184 = sphi 0, %s183
      %s198 = sphi 0, %s184
      %s204 = sphi 0, %s206
      %s207 = sphi 0, %s204
      %s208 = sphi 0, %s207
      %s224 = sphi 0, %s208
    $region4: #{tpu_custom_call.1} parent=1 // loop_header_branch
      %24 = sbr.rel (%p22) target = $region8
    $region5: #{tpu_custom_call.1} parent=1 // loop_body
      %s26 = ssub.s32 %s21, 1
      %s27 = ssub.s32 %s21, 2
      %s28 = sadd.s32 %s21, 1
      %s29 = ssub.s32 %s21, %s28
      %p30 = scmp.eq.s32.totalorder %s29, 0
      %s32 = sadd.s32 %s31, 1
      %s33 = scalar_select %p30, %s31, %s32
      %p36 = pneg %p30
      %p37 = scmp.eq.s32.totalorder %s21, 1
      %p38 = por %p36, %p37
      %p39 = scmp.ne.s32.totalorder %s31, %s34
      %p40 = scmp.eq.s32.totalorder %s21, 0
      %p41 = por %p39, %p40
      %p42 = scmp.ne.s32.totalorder %s31, %s34
      %p43 = scmp.eq.s32.totalorder %s26, 1
      %p44 = por %p42, %p43
      %p45 = scmp.ne.s32.totalorder %s34, %s35
      %p46 = scmp.eq.s32.totalorder %s26, 0
      %p47 = por %p45, %p46
      %p48 = scmp.ne.s32.totalorder %s34, %s35
      %p49 = scmp.eq.s32.totalorder %s27, 1
      %p50 = por %p48, %p49
      %p52 = scmp.ne.s32.totalorder %s35, %s51
      %p53 = scmp.eq.s32.totalorder %s27, 0
      %p54 = por %p52, %p53
      %s56 = sadd.s32 %s55, 1
      %p59 = scmp.eq.s32.totalorder %s21, 1
      %p60 = scmp.ne.s32.totalorder %s55, %s57
      %p61 = scmp.eq.s32.totalorder %s21, 0
      %p62 = por %p60, %p61
      %p63 = scmp.ne.s32.totalorder %s55, %s57
      %p64 = scmp.eq.s32.totalorder %s26, 1
      %p65 = por %p63, %p64
      %p66 = scmp.ne.s32.totalorder %s57, %s58
      %p67 = scmp.eq.s32.totalorder %s26, 0
      %p68 = por %p66, %p67
      %p69 = scmp.ne.s32.totalorder %s57, %s58
      %p70 = scmp.eq.s32.totalorder %s27, 1
      %p71 = por %p69, %p70
      %p73 = scmp.ne.s32.totalorder %s58, %s72
      %p74 = scmp.eq.s32.totalorder %s27, 0
      %p75 = por %p73, %p74
      %s77 = sadd.s32 %s76, 1
      %p80 = scmp.eq.s32.totalorder %s21, 1
      %p81 = scmp.ne.s32.totalorder %s76, %s78
      %p82 = scmp.eq.s32.totalorder %s21, 0
      %p83 = por %p81, %p82
      %p84 = scmp.ne.s32.totalorder %s76, %s78
      %p85 = scmp.eq.s32.totalorder %s26, 1
      %p86 = por %p84, %p85
      %p87 = scmp.ne.s32.totalorder %s78, %s79
      %p88 = scmp.eq.s32.totalorder %s26, 0
      %p89 = por %p87, %p88
      %p90 = scmp.ne.s32.totalorder %s78, %s79
      %p91 = scmp.eq.s32.totalorder %s27, 1
      %p92 = por %p90, %p91
      %p94 = scmp.ne.s32.totalorder %s79, %s93
      %p95 = scmp.eq.s32.totalorder %s27, 0
      %p96 = por %p94, %p95
      %s98 = sadd.s32 %s97, 1
      %p101 = scmp.eq.s32.totalorder %s21, 1
      %p102 = scmp.ne.s32.totalorder %s97, %s99
      %p103 = scmp.eq.s32.totalorder %s21, 0
      %p104 = por %p102, %p103
      %p105 = scmp.ne.s32.totalorder %s97, %s99
      %p106 = scmp.eq.s32.totalorder %s26, 1
      %p107 = por %p105, %p106
      %p108 = scmp.ne.s32.totalorder %s99, %s100
      %p109 = scmp.eq.s32.totalorder %s26, 0
      %p110 = por %p108, %p109
      %p111 = scmp.ne.s32.totalorder %s99, %s100
      %p112 = scmp.eq.s32.totalorder %s27, 1
      %p113 = por %p111, %p112
      %p115 = scmp.ne.s32.totalorder %s100, %s114
      %p116 = scmp.eq.s32.totalorder %s27, 0
      %p117 = por %p115, %p116
      %s119 = sadd.s32 %s118, 1
      %p122 = scmp.eq.s32.totalorder %s21, 1
      %p123 = scmp.ne.s32.totalorder %s118, %s120
      %p124 = scmp.eq.s32.totalorder %s21, 0
      %p125 = por %p123, %p124
      %p126 = scmp.ne.s32.totalorder %s118, %s120
      %p127 = scmp.eq.s32.totalorder %s26, 1
      %p128 = por %p126, %p127
      %p129 = scmp.ne.s32.totalorder %s120, %s121
      %p130 = scmp.eq.s32.totalorder %s26, 0
      %p131 = por %p129, %p130
      %p132 = scmp.ne.s32.totalorder %s120, %s121
      %p133 = scmp.eq.s32.totalorder %s27, 1
      %p134 = por %p132, %p133
      %p136 = scmp.ne.s32.totalorder %s121, %s135
      %p137 = scmp.eq.s32.totalorder %s27, 0
      %p138 = por %p136, %p137
      %s140 = sadd.s32 %s139, 1
      %p143 = scmp.eq.s32.totalorder %s21, 1
      %p144 = scmp.ne.s32.totalorder %s139, %s141
      %p145 = scmp.eq.s32.totalorder %s21, 0
      %p146 = por %p144, %p145
      %p147 = scmp.ne.s32.totalorder %s139, %s141
      %p148 = scmp.eq.s32.totalorder %s26, 1
      %p149 = por %p147, %p148
      %p150 = scmp.ne.s32.totalorder %s141, %s142
      %p151 = scmp.eq.s32.totalorder %s26, 0
      %p152 = por %p150, %p151
      %p153 = scmp.ne.s32.totalorder %s141, %s142
      %p154 = scmp.eq.s32.totalorder %s27, 1
      %p155 = por %p153, %p154
      %p157 = scmp.ne.s32.totalorder %s142, %s156
      %p158 = scmp.eq.s32.totalorder %s27, 0
      %p159 = por %p157, %p158
      %s161 = sadd.s32 %s160, 1
      %p164 = scmp.eq.s32.totalorder %s21, 1
      %p165 = scmp.ne.s32.totalorder %s160, %s162
      %p166 = scmp.eq.s32.totalorder %s21, 0
      %p167 = por %p165, %p166
      %p168 = scmp.ne.s32.totalorder %s160, %s162
      %p169 = scmp.eq.s32.totalorder %s26, 1
      %p170 = por %p168, %p169
      %p171 = scmp.ne.s32.totalorder %s162, %s163
      %p172 = scmp.eq.s32.totalorder %s26, 0
      %p173 = por %p171, %p172
      %p174 = scmp.ne.s32.totalorder %s162, %s163
      %p175 = scmp.eq.s32.totalorder %s27, 1
      %p176 = por %p174, %p175
      %p178 = scmp.ne.s32.totalorder %s163, %s177
      %p179 = scmp.eq.s32.totalorder %s27, 0
      %p180 = por %p178, %p179
      %s182 = sadd.s32 %s181, 1
      %p185 = scmp.eq.s32.totalorder %s21, 1
      %p186 = scmp.ne.s32.totalorder %s181, %s183
      %p187 = scmp.eq.s32.totalorder %s21, 0
      %p188 = por %p186, %p187
      %p189 = scmp.ne.s32.totalorder %s181, %s183
      %p190 = scmp.eq.s32.totalorder %s26, 1
      %p191 = por %p189, %p190
      %p192 = scmp.ne.s32.totalorder %s183, %s184
      %p193 = scmp.eq.s32.totalorder %s26, 0
      %p194 = por %p192, %p193
      %p195 = scmp.ne.s32.totalorder %s183, %s184
      %p196 = scmp.eq.s32.totalorder %s27, 1
      %p197 = por %p195, %p196
      %p199 = scmp.ne.s32.totalorder %s184, %s198
      %p200 = scmp.eq.s32.totalorder %s27, 0
      %p201 = por %p199, %p200
      %s202 = ssub.s32 %s21, %s28
      %p203 = scmp.eq.s32.totalorder %s202, 0
      %s205 = sadd.s32 %s204, 1
      %s206 = scalar_select %p203, %s204, %s205
      %p209 = pneg %p203
      %p210 = scmp.eq.s32.totalorder %s21, 1
      %p211 = por %p209, %p210
      %p212 = scmp.ne.s32.totalorder %s204, %s207
      %p213 = scmp.eq.s32.totalorder %s21, 0
      %p214 = por %p212, %p213
      %p215 = scmp.ne.s32.totalorder %s204, %s207
      %p216 = scmp.eq.s32.totalorder %s26, 1
      %p217 = por %p215, %p216
      %p218 = scmp.ne.s32.totalorder %s207, %s208
      %p219 = scmp.eq.s32.totalorder %s26, 0
      %p220 = por %p218, %p219
      %p221 = scmp.ne.s32.totalorder %s207, %s208
      %p222 = scmp.eq.s32.totalorder %s27, 1
      %p223 = por %p221, %p222
      %p225 = scmp.ne.s32.totalorder %s208, %s224
      %p226 = scmp.eq.s32.totalorder %s27, 0
      %p227 = por %p225, %p226
      %p228 = scmp.le.s32.totalorder 1, %s21
      %p229 = scmp.lt.s32.totalorder %s21, 3
      %p230 = pnand %p228, %p229
      %p231 = pneg %p230
      // Predicated region
      $region9: #{tpu_custom_call.1} parent=5 // pred_check
        _
      $region10: #{tpu_custom_call.1} parent=5 // pred_check_branch
        %233 = sbr.rel (%p230) target = $region12
      $region11: #{tpu_custom_call.1} parent=5 // pred_region
        %s234 = ssub.s32 %s21, 1
        // Predicated region
        $region13: #{tpu_custom_call.1} parent=11 // pred_check
          %p235 = pneg %p68
        $region14: #{tpu_custom_call.1} parent=11 // pred_check_branch
          %237 = sbr.rel (%p235) target = $region16
        $region15: #{tpu_custom_call.1} parent=11 // pred_region
          _
        $region16: #{tpu_custom_call.1} parent=11 // pred_fallthru
          _
        // Predicated region
        $region17: #{tpu_custom_call.1} parent=11 // pred_check
          %p238 = pneg %p89
        $region18: #{tpu_custom_call.1} parent=11 // pred_check_branch
          %240 = sbr.rel (%p238) target = $region20
        $region19: #{tpu_custom_call.1} parent=11 // pred_region
          _
        $region20: #{tpu_custom_call.1} parent=11 // pred_fallthru
          _
        // Predicated region
        $region21: #{tpu_custom_call.1} parent=11 // pred_check
          %p241 = pneg %p110
        $region22: #{tpu_custom_call.1} parent=11 // pred_check_branch
          %243 = sbr.rel (%p241) target = $region24
        $region23: #{tpu_custom_call.1} parent=11 // pred_region
          _
        $region24: #{tpu_custom_call.1} parent=11 // pred_fallthru
          _
        // Predicated region
        $region25: #{tpu_custom_call.1} parent=11 // pred_check
          %p244 = pneg %p131
        $region26: #{tpu_custom_call.1} parent=11 // pred_check_branch
          %246 = sbr.rel (%p244) target = $region28
        $region27: #{tpu_custom_call.1} parent=11 // pred_region
          _
        $region28: #{tpu_custom_call.1} parent=11 // pred_fallthru
          _
        // Predicated region
        $region29: #{tpu_custom_call.1} parent=11 // pred_check
          %p247 = pneg %p152
        $region30: #{tpu_custom_call.1} parent=11 // pred_check_branch
          %249 = sbr.rel (%p247) target = $region32
        $region31: #{tpu_custom_call.1} parent=11 // pred_region
          %s251 = ssub.s32 128, 128
          %252 = vsyncadd [#allocation6], %s251
          %s254 = sshll.u32 [#allocation5], 4
          %s255 = int_to_ptr.vmem [resolvable:$true] %s254
          %257 = dma.hbm_to_vmem [thread:$0]  %s5, 128, %s255, [#allocation6]
        $region32: #{tpu_custom_call.1} parent=11 // pred_fallthru
          _
        // Predicated region
        $region33: #{tpu_custom_call.1} parent=11 // pred_check
          %p258 = pneg %p173
        $region34: #{tpu_custom_call.1} parent=11 // pred_check_branch
          %260 = sbr.rel (%p258) target = $region36
        $region35: #{tpu_custom_call.1} parent=11 // pred_region
          _
        $region36: #{tpu_custom_call.1} parent=11 // pred_fallthru
          _
        // Predicated region
        $region37: #{tpu_custom_call.1} parent=11 // pred_check
          %p261 = pneg %p194
        $region38: #{tpu_custom_call.1} parent=11 // pred_check_branch
          %263 = sbr.rel (%p261) target = $region40
        $region39: #{tpu_custom_call.1} parent=11 // pred_region
          _
        $region40: #{tpu_custom_call.1} parent=11 // pred_fallthru
          _
      $region12: #{tpu_custom_call.1} parent=5 // pred_fallthru
        _
      %p264 = scmp.lt.s32.totalorder %s21, 2
      // Predicated region
      $region41: #{tpu_custom_call.1} parent=5 // pred_check
        %p265 = pneg %p264
      $region42: #{tpu_custom_call.1} parent=5 // pred_check_branch
        %267 = sbr.rel (%p265) target = $region44
      $region43: #{tpu_custom_call.1} parent=5 // pred_region
        // Predicated region
        $region45: #{tpu_custom_call.1} parent=43 // pred_check
          %p268 = pneg %p41
        $region46: #{tpu_custom_call.1} parent=43 // pred_check_branch
          %270 = sbr.rel (%p268) target = $region48
        $region47: #{tpu_custom_call.1} parent=43 // pred_region
          %s271 = sand.u32 %s31, 1
          %s272 = scalar_lea.sflag [#allocation3], %s271
          %s273 = sand.u32 %s31, 1
          %s274 = smul.addr %s273, 16
          %s275 = scalar_lea.vmem [#allocation2], %s274
          %s277 = ssub.s32 256, 256
          %278 = vsyncadd %s272, %s277
          %s279 = smul.addr %s21, 2
          %s280 = smul.addr %s279, 128
          %s281 = scalar_lea.hbm %s0, %s280
          %s283 = sshll.u32 %s275, 4
          %s284 = int_to_ptr.vmem [resolvable:$true] %s283
          %286 = dma.hbm_to_vmem [thread:$0]  %s281, 256, %s284, %s272
        $region48: #{tpu_custom_call.1} parent=43 // pred_fallthru
          _
      $region44: #{tpu_custom_call.1} parent=5 // pred_fallthru
        _
      %p287 = scmp.le.s32.totalorder 1, %s21
      %p288 = scmp.lt.s32.totalorder %s21, 3
      %p289 = pnand %p287, %p288
      %p290 = pneg %p289
      // Predicated region
      $region49: #{tpu_custom_call.1} parent=5 // pred_check
        _
      $region50: #{tpu_custom_call.1} parent=5 // pred_check_branch
        %292 = sbr.rel (%p289) target = $region52
      $region51: #{tpu_custom_call.1} parent=5 // pred_region
        %s293 = ssub.s32 %s21, 1
        %s294 = sand.u32 %s34, 1
        %s295 = scalar_lea.sflag [#allocation3], %s294
        %s296 = sand.u32 %s34, 1
        %s297 = smul.addr %s296, 16
        %s298 = scalar_lea.vmem [#allocation2], %s297
        // Predicated region
        $region53: #{tpu_custom_call.1} parent=51 // pred_check
          %p299 = pneg %p47
        $region54: #{tpu_custom_call.1} parent=51 // pred_check_branch
          %301 = sbr.rel (%p299) target = $region56
        $region55: #{tpu_custom_call.1} parent=51 // pred_region
          %302 = dma.done %s295, 256
        $region56: #{tpu_custom_call.1} parent=51 // pred_fallthru
          _
        // Predicated region
        $region57: #{tpu_custom_call.1} parent=51 // pred_check
          %p303 = pneg %p152
        $region58: #{tpu_custom_call.1} parent=51 // pred_check_branch
          %305 = sbr.rel (%p303) target = $region60
        $region59: #{tpu_custom_call.1} parent=51 // pred_region
          %306 = dma.done [#allocation6], 128
        $region60: #{tpu_custom_call.1} parent=51 // pred_fallthru
          _
        %s307 = sand.u32 %s34, 1
        %s308 = scalar_lea.sflag [#allocation3], %s307
        %s309 = sand.u32 %s34, 1
        %s310 = smul.addr %s309, 16
        %s311 = scalar_lea.vmem [#allocation2], %s310
        %p312 = pneg %p47
        %p313 = pneg %p44
        %p314 = pneg %p68
        %p315 = pneg %p65
        %p316 = pneg %p89
        %p317 = pneg %p86
        %p318 = pneg %p110
        %p319 = pneg %p107
        %p320 = pneg %p131
        %p321 = pneg %p128
        %p322 = pneg %p152
        %p323 = pneg %p149
        %p324 = pneg %p173
        %p325 = pneg %p170
        %p326 = pneg %p194
        %p327 = pneg %p191
        %p328 = pneg %p220
        %p329 = pneg %p217
        %s330 = sand.u32 %s207, 1
        %s331 = scalar_lea.sflag [#allocation4], %s330
        %s332 = sand.u32 %s207, 1
        %s333 = smul.addr %s332, 16
        %s334 = scalar_lea.vmem [#allocation7], %s333
        %v335 = vld [vmem:[%s298] sm:$0xff]
        %v336 = vld [vmem:[%s298 + $0x8] sm:$0xff]
        %v337 = vld [vmem:[%s1] sm:$0xff]
        %v338 = vld [vmem:[%s2] sm:$0xff]
        %340 = vset.pattern.permute.xlu0 0
        %341 = vperm.xlu0 %340, %v338
        %v342 = vpop.permute.xlu0 %341
        %vm344 = vcmask 64512
        %v346 = vsel %vm344, %v337, 0
        %348 = vmatprep.subr.mxu0 %v336
        %349 = vmatpush1.msra.mxu0 %v335
        %350 = vmatprep.subr.mxu0 0.0
        %351 = vmatpush1.msra.mxu0 0.0
        %352 = vmatprep.subr.mxu0 0.0
        %353 = vmatpush1.msra.mxu0 0.0
        %354 = vmatprep.subr.mxu0 0.0
        %355 = vmatpush1.msra.mxu0 0.0
        %356 = vmatprep.subr.mxu0 0.0
        %357 = vmatpush1.msra.mxu0 0.0
        %358 = vmatprep.subr.mxu0 0.0
        %359 = vmatpush1.msra.mxu0 0.0
        %360 = vmatprep.subr.mxu0 0.0
        %361 = vmatpush1.msra.mxu0 0.0
        %362 = vmatprep.subr.mxu0 0.0
        %363 = vmatpush1.msra.mxu0 0.0
        %364 = vmatprep.subr.mxu0 0.0
        %365 = vmatpush1.msra.mxu0 0.0
        %366 = vmatprep.subr.mxu0 0.0
        %367 = vmatpush1.msra.mxu0 0.0
        %368 = vmatprep.subr.mxu0 0.0
        %369 = vmatpush1.msra.mxu0 0.0
        %370 = vmatprep.subr.mxu0 0.0
        %371 = vmatpush1.msra.mxu0 0.0
        %372 = vmatprep.subr.mxu0 0.0
        %373 = vmatpush1.msra.mxu0 0.0
        %374 = vmatprep.subr.mxu0 0.0
        %375 = vmatpush1.msra.mxu0 0.0
        %376 = vmatprep.subr.mxu0 0.0
        %377 = vmatpush1.msra.mxu0 0.0
        %378 = vmatprep.subr.mxu0 0.0
        %379 = vmatpush1.msra.mxu0 0.0
        %380 = vmatprep.subr.mxu0 0.0
        %381 = vmatpush1.msra.mxu0 0.0
        %382 = vmatprep.subr.mxu0 0.0
        %383 = vmatpush1.msra.mxu0 0.0
        %384 = vmatprep.subr.mxu0 0.0
        %385 = vmatpush1.msra.mxu0 0.0
        %386 = vmatprep.subr.mxu0 0.0
        %387 = vmatpush1.msra.mxu0 0.0
        %388 = vmatprep.subr.mxu0 0.0
        %389 = vmatpush1.msra.mxu0 0.0
        %390 = vmatprep.subr.mxu0 0.0
        %391 = vmatpush1.msra.mxu0 0.0
        %392 = vmatprep.subr.mxu0 0.0
        %393 = vmatpush1.msra.mxu0 0.0
        %394 = vmatprep.subr.mxu0 0.0
        %395 = vmatpush1.msra.mxu0 0.0
        %396 = vmatprep.subr.mxu0 0.0
        %397 = vmatpush1.msra.mxu0 0.0
        %398 = vmatprep.subr.mxu0 0.0
        %399 = vmatpush1.msra.mxu0 0.0
        %400 = vmatprep.subr.mxu0 0.0
        %401 = vmatpush1.msra.mxu0 0.0
        %402 = vmatprep.subr.mxu0 0.0
        %403 = vmatpush1.msra.mxu0 0.0
        %404 = vmatprep.subr.mxu0 0.0
        %405 = vmatpush1.msra.mxu0 0.0
        %406 = vmatprep.subr.mxu0 0.0
        %407 = vmatpush1.msra.mxu0 0.0
        %408 = vmatprep.subr.mxu0 0.0
        %409 = vmatpush1.msra.mxu0 0.0
        %410 = vmatprep.subr.mxu0 0.0
        %411 = vmatpush1.msra.mxu0 0.0
        %412 = vmatprep.mubr.f32.mxu0 0.0
        %413 = vmatmul.mubr.f32.gmra.mrb[0].mxu0 %v346
        %v414 = vpop.f32.mrb[0].mxu0
        %v415 = vadd.f32 %v342, %v414
        %v416 = vpop.f32.mrb[0].mxu0
        %v417 = vadd.f32 %v342, %v416
        %418 = vdwg.mxu0
        %v419 = vmax.f32 %v415, 0.0
        %v420 = vmax.f32 %v417, 0.0
        %421 = vrot.lane.b32.xlu0 %v419, 17
        %v422 = vpop.permute.xlu0 %421
        %423 = vrot.lane.b32.xlu0 %v420, 17
        %v424 = vpop.permute.xlu0 %423
        %v425 = vlaneseq
        %v426 = vand.u32 %v425, 127
        %vm427 = vcmp.lt.s32.totalorder %v426, 17
        %v428 = vsel %vm427, %v422, %v424
        %v429 = vsel %vm427, %v424, %v422
        %v430 = vld [vmem:[%s7] ss:$8 sm:$0x3]
        %v432 = vlaneseq
        %v433 = vshrl.u32 %v432, 7
        %v434 = vsub.s32 0, %v433
        %v435 = vrot.slane %v430, %v434
        %v436 = vlaneseq
        %v437 = vshrl.u32 %v436, 7
        %v438 = vsub.s32 1, %v437
        %v439 = vrot.slane %v430, %v438
        %v442 = vmul.f32 %v429, %v435
        %v443 = vmul.f32 %v428, %v439
        %444 = vrot.lane.b32.xlu0 %v419, 16
        %v445 = vpop.permute.xlu0 %444
        %446 = vrot.lane.b32.xlu0 %v420, 16
        %v447 = vpop.permute.xlu0 %446
        %vm448 = vcmp.lt.s32.totalorder %v426, 16
        %v449 = vsel %vm448, %v445, %v447
        %v450 = vsel %vm448, %v447, %v445
        %s451 = scalar_lea.vmem %s7, 1
        %v452 = vld [vmem:[%s451] ss:$8 sm:$0x3]
        %v454 = vlaneseq
        %v455 = vshrl.u32 %v454, 7
        %v456 = vsub.s32 0, %v455
        %v457 = vrot.slane %v452, %v456
        %v458 = vlaneseq
        %v459 = vshrl.u32 %v458, 7
        %v460 = vsub.s32 1, %v459
        %v461 = vrot.slane %v452, %v460
        %v464 = vmul.f32 %v450, %v457
        %v465 = vmul.f32 %v449, %v461
        %466 = vrot.lane.b32.xlu0 %v419, 15
        %v467 = vpop.permute.xlu0 %466
        %468 = vrot.lane.b32.xlu0 %v420, 15
        %v469 = vpop.permute.xlu0 %468
        %vm470 = vcmp.lt.s32.totalorder %v426, 15
        %v471 = vsel %vm470, %v467, %v469
        %v472 = vsel %vm470, %v469, %v467
        %s473 = scalar_lea.vmem %s7, 2
        %v474 = vld [vmem:[%s473] ss:$8 sm:$0x3]
        %v476 = vlaneseq
        %v477 = vshrl.u32 %v476, 7
        %v478 = vsub.s32 0, %v477
        %v479 = vrot.slane %v474, %v478
        %v480 = vlaneseq
        %v481 = vshrl.u32 %v480, 7
        %v482 = vsub.s32 1, %v481
        %v483 = vrot.slane %v474, %v482
        %v486 = vmul.f32 %v472, %v479
        %v487 = vmul.f32 %v471, %v483
        %488 = vrot.lane.b32.xlu0 %v419, 1
        %v489 = vpop.permute.xlu0 %488
        %490 = vrot.lane.b32.xlu0 %v420, 1
        %v491 = vpop.permute.xlu0 %490
        %vm492 = vcmp.lt.s32.totalorder %v426, 1
        %v493 = vsel %vm492, %v489, %v491
        %v494 = vsel %vm492, %v491, %v489
        %s495 = scalar_lea.vmem %s7, 3
        %v496 = vld [vmem:[%s495] ss:$8 sm:$0x3]
        %v498 = vlaneseq
        %v499 = vshrl.u32 %v498, 7
        %v500 = vsub.s32 0, %v499
        %v501 = vrot.slane %v496, %v500
        %v502 = vlaneseq
        %v503 = vshrl.u32 %v502, 7
        %v504 = vsub.s32 1, %v503
        %v505 = vrot.slane %v496, %v504
        %v508 = vmul.f32 %v494, %v501
        %v509 = vmul.f32 %v493, %v505
        %510 = vrot.lane.b32.xlu0 %v419, 127
        %v511 = vpop.permute.xlu0 %510
        %512 = vrot.lane.b32.xlu0 %v420, 127
        %v513 = vpop.permute.xlu0 %512
        %vm514 = vcmp.lt.s32.totalorder %v426, 127
        %v515 = vsel %vm514, %v511, %v513
        %v516 = vsel %vm514, %v513, %v511
        %s517 = scalar_lea.vmem %s7, 5
        %v518 = vld [vmem:[%s517] ss:$8 sm:$0x3]
        %v520 = vlaneseq
        %v521 = vshrl.u32 %v520, 7
        %v522 = vsub.s32 0, %v521
        %v523 = vrot.slane %v518, %v522
        %v524 = vlaneseq
        %v525 = vshrl.u32 %v524, 7
        %v526 = vsub.s32 1, %v525
        %v527 = vrot.slane %v518, %v526
        %v530 = vmul.f32 %v515, %v523
        %v531 = vmul.f32 %v516, %v527
        %532 = vrot.lane.b32.xlu0 %v419, 113
        %v533 = vpop.permute.xlu0 %532
        %534 = vrot.lane.b32.xlu0 %v420, 113
        %v535 = vpop.permute.xlu0 %534
        %vm536 = vcmp.lt.s32.totalorder %v426, 113
        %v537 = vsel %vm536, %v533, %v535
        %v538 = vsel %vm536, %v535, %v533
        %s539 = scalar_lea.vmem %s7, 6
        %v540 = vld [vmem:[%s539] ss:$8 sm:$0x3]
        %v542 = vlaneseq
        %v543 = vshrl.u32 %v542, 7
        %v544 = vsub.s32 0, %v543
        %v545 = vrot.slane %v540, %v544
        %v546 = vlaneseq
        %v547 = vshrl.u32 %v546, 7
        %v548 = vsub.s32 1, %v547
        %v549 = vrot.slane %v540, %v548
        %v552 = vmul.f32 %v537, %v545
        %v553 = vmul.f32 %v538, %v549
        %554 = vrot.lane.b32.xlu0 %v419, 112
        %v555 = vpop.permute.xlu0 %554
        %556 = vrot.lane.b32.xlu0 %v420, 112
        %v557 = vpop.permute.xlu0 %556
        %vm558 = vcmp.lt.s32.totalorder %v426, 112
        %v559 = vsel %vm558, %v555, %v557
        %v560 = vsel %vm558, %v557, %v555
        %s561 = scalar_lea.vmem %s7, 7
        %v562 = vld [vmem:[%s561] ss:$8 sm:$0x3]
        %v564 = vlaneseq
        %v565 = vshrl.u32 %v564, 7
        %v566 = vsub.s32 0, %v565
        %v567 = vrot.slane %v562, %v566
        %v568 = vlaneseq
        %v569 = vshrl.u32 %v568, 7
        %v570 = vsub.s32 1, %v569
        %v571 = vrot.slane %v562, %v570
        %v574 = vmul.f32 %v559, %v567
        %v575 = vmul.f32 %v560, %v571
        %576 = vrot.lane.b32.xlu0 %v419, 111
        %v577 = vpop.permute.xlu0 %576
        %578 = vrot.lane.b32.xlu0 %v420, 111
        %v579 = vpop.permute.xlu0 %578
        %vm580 = vcmp.lt.s32.totalorder %v426, 111
        %v581 = vsel %vm580, %v577, %v579
        %v582 = vsel %vm580, %v579, %v577
        %s583 = scalar_lea.vmem %s7, 16
        %v584 = vld [vmem:[%s583] ss:$8 sm:$0x3]
        %v586 = vlaneseq
        %v587 = vshrl.u32 %v586, 7
        %v588 = vsub.s32 0, %v587
        %v589 = vrot.slane %v584, %v588
        %v590 = vlaneseq
        %v591 = vshrl.u32 %v590, 7
        %v592 = vsub.s32 1, %v591
        %v593 = vrot.slane %v584, %v592
        %v596 = vmul.f32 %v581, %v589
        %v597 = vmul.f32 %v582, %v593
        %v598 = vld [vmem:[%s3] sm:$0xff]
        %v599 = vld [vmem:[%s4] sm:$0xff]
        %601 = vset.pattern.permute.xlu0 0
        %602 = vperm.xlu0 %601, %v599
        %v603 = vpop.permute.xlu0 %602
        %vm605 = vcmask 588800
        %v607 = vsel %vm605, %v598, 0
        %609 = vmatprep.subr.mxu0 %v443
        %610 = vmatpush1.msra.mxu0 %v442
        %611 = vmatprep.subr.mxu0 %v465
        %612 = vmatpush1.msra.mxu0 %v464
        %613 = vmatprep.subr.mxu0 %v487
        %614 = vmatpush1.msra.mxu0 %v486
        %615 = vmatprep.subr.mxu0 %v509
        %616 = vmatpush1.msra.mxu0 %v508
        %617 = vmatprep.subr.mxu0 %v420
        %618 = vmatpush1.msra.mxu0 %v419
        %619 = vmatprep.subr.mxu0 %v531
        %620 = vmatpush1.msra.mxu0 %v530
        %621 = vmatprep.subr.mxu0 %v553
        %622 = vmatpush1.msra.mxu0 %v552
        %623 = vmatprep.subr.mxu0 %v575
        %624 = vmatpush1.msra.mxu0 %v574
        %625 = vmatprep.subr.mxu0 %v597
        %626 = vmatpush1.msra.mxu0 %v596
        %627 = vmatprep.subr.mxu0 0.0
        %628 = vmatpush1.msra.mxu0 0.0
        %629 = vmatprep.subr.mxu0 0.0
        %630 = vmatpush1.msra.mxu0 0.0
        %631 = vmatprep.subr.mxu0 0.0
        %632 = vmatpush1.msra.mxu0 0.0
        %633 = vmatprep.subr.mxu0 0.0
        %634 = vmatpush1.msra.mxu0 0.0
        %635 = vmatprep.subr.mxu0 0.0
        %636 = vmatpush1.msra.mxu0 0.0
        %637 = vmatprep.subr.mxu0 0.0
        %638 = vmatpush1.msra.mxu0 0.0
        %639 = vmatprep.subr.mxu0 0.0
        %640 = vmatpush1.msra.mxu0 0.0
        %641 = vmatprep.subr.mxu0 0.0
        %642 = vmatpush1.msra.mxu0 0.0
        %643 = vmatprep.subr.mxu0 0.0
        %644 = vmatpush1.msra.mxu0 0.0
        %645 = vmatprep.subr.mxu0 0.0
        %646 = vmatpush1.msra.mxu0 0.0
        %647 = vmatprep.subr.mxu0 0.0
        %648 = vmatpush1.msra.mxu0 0.0
        %649 = vmatprep.subr.mxu0 0.0
        %650 = vmatpush1.msra.mxu0 0.0
        %651 = vmatprep.subr.mxu0 0.0
        %652 = vmatpush1.msra.mxu0 0.0
        %653 = vmatprep.subr.mxu0 0.0
        %654 = vmatpush1.msra.mxu0 0.0
        %655 = vmatprep.subr.mxu0 0.0
        %656 = vmatpush1.msra.mxu0 0.0
        %657 = vmatprep.subr.mxu0 0.0
        %658 = vmatpush1.msra.mxu0 0.0
        %659 = vmatprep.subr.mxu0 0.0
        %660 = vmatpush1.msra.mxu0 0.0
        %661 = vmatprep.subr.mxu0 0.0
        %662 = vmatpush1.msra.mxu0 0.0
        %663 = vmatprep.subr.mxu0 0.0
        %664 = vmatpush1.msra.mxu0 0.0
        %665 = vmatprep.subr.mxu0 0.0
        %666 = vmatpush1.msra.mxu0 0.0
        %667 = vmatprep.subr.mxu0 0.0
        %668 = vmatpush1.msra.mxu0 0.0
        %669 = vmatprep.subr.mxu0 0.0
        %670 = vmatpush1.msra.mxu0 0.0
        %671 = vmatprep.subr.mxu0 0.0
        %672 = vmatpush1.msra.mxu0 0.0
        %673 = vmatprep.mubr.f32.mxu0 0.0
        %674 = vmatmul.mubr.f32.gmra.mrb[0].mxu0 %v607
        %v675 = vpop.f32.mrb[0].mxu0
        %v676 = vadd.f32 %v603, %v675
        %v677 = vpop.f32.mrb[0].mxu0
        %v678 = vadd.f32 %v603, %v677
        %679 = vdwg.mxu0
        %v680 = vmax.f32 %v676, 0.0
        %v681 = vmax.f32 %v678, 0.0
        %v682 = vld [vmem:[#allocation5] sm:$0xff]
        %v683 = vld [vmem:[%s6] sm:$0xff]
        %685 = vset.pattern.permute.xlu0 0
        %686 = vperm.xlu0 %685, %v683
        %v687 = vpop.permute.xlu0 %686
        %v690 = vsel %vm344, %v682, 0
        %692 = vmatprep.subr.mxu0 %v681
        %693 = vmatpush1.msra.mxu0 %v680
        %694 = vmatprep.subr.mxu0 0.0
        %695 = vmatpush1.msra.mxu0 0.0
        %696 = vmatprep.subr.mxu0 0.0
        %697 = vmatpush1.msra.mxu0 0.0
        %698 = vmatprep.subr.mxu0 0.0
        %699 = vmatpush1.msra.mxu0 0.0
        %700 = vmatprep.subr.mxu0 0.0
        %701 = vmatpush1.msra.mxu0 0.0
        %702 = vmatprep.subr.mxu0 0.0
        %703 = vmatpush1.msra.mxu0 0.0
        %704 = vmatprep.subr.mxu0 0.0
        %705 = vmatpush1.msra.mxu0 0.0
        %706 = vmatprep.subr.mxu0 0.0
        %707 = vmatpush1.msra.mxu0 0.0
        %708 = vmatprep.subr.mxu0 0.0
        %709 = vmatpush1.msra.mxu0 0.0
        %710 = vmatprep.subr.mxu0 0.0
        %711 = vmatpush1.msra.mxu0 0.0
        %712 = vmatprep.subr.mxu0 0.0
        %713 = vmatpush1.msra.mxu0 0.0
        %714 = vmatprep.subr.mxu0 0.0
        %715 = vmatpush1.msra.mxu0 0.0
        %716 = vmatprep.subr.mxu0 0.0
        %717 = vmatpush1.msra.mxu0 0.0
        %718 = vmatprep.subr.mxu0 0.0
        %719 = vmatpush1.msra.mxu0 0.0
        %720 = vmatprep.subr.mxu0 0.0
        %721 = vmatpush1.msra.mxu0 0.0
        %722 = vmatprep.subr.mxu0 0.0
        %723 = vmatpush1.msra.mxu0 0.0
        %724 = vmatprep.subr.mxu0 0.0
        %725 = vmatpush1.msra.mxu0 0.0
        %726 = vmatprep.subr.mxu0 0.0
        %727 = vmatpush1.msra.mxu0 0.0
        %728 = vmatprep.subr.mxu0 0.0
        %729 = vmatpush1.msra.mxu0 0.0
        %730 = vmatprep.subr.mxu0 0.0
        %731 = vmatpush1.msra.mxu0 0.0
        %732 = vmatprep.subr.mxu0 0.0
        %733 = vmatpush1.msra.mxu0 0.0
        %734 = vmatprep.subr.mxu0 0.0
        %735 = vmatpush1.msra.mxu0 0.0
        %736 = vmatprep.subr.mxu0 0.0
        %737 = vmatpush1.msra.mxu0 0.0
        %738 = vmatprep.subr.mxu0 0.0
        %739 = vmatpush1.msra.mxu0 0.0
        %740 = vmatprep.subr.mxu0 0.0
        %741 = vmatpush1.msra.mxu0 0.0
        %742 = vmatprep.subr.mxu0 0.0
        %743 = vmatpush1.msra.mxu0 0.0
        %744 = vmatprep.subr.mxu0 0.0
        %745 = vmatpush1.msra.mxu0 0.0
        %746 = vmatprep.subr.mxu0 0.0
        %747 = vmatpush1.msra.mxu0 0.0
        %748 = vmatprep.subr.mxu0 0.0
        %749 = vmatpush1.msra.mxu0 0.0
        %750 = vmatprep.subr.mxu0 0.0
        %751 = vmatpush1.msra.mxu0 0.0
        %752 = vmatprep.subr.mxu0 0.0
        %753 = vmatpush1.msra.mxu0 0.0
        %754 = vmatprep.subr.mxu0 0.0
        %755 = vmatpush1.msra.mxu0 0.0
        %756 = vmatprep.mubr.f32.mxu0 0.0
        %757 = vmatmul.mubr.f32.gmra.mrb[0].mxu0 %v690
        %v758 = vpop.f32.mrb[0].mxu0
        %v759 = vadd.f32 %v687, %v758
        %v760 = vpop.f32.mrb[0].mxu0
        %v761 = vadd.f32 %v687, %v760
        %762 = vdwg.mxu0
        %v763 = vadd.f32 %v759, %v335
        %v764 = vadd.f32 %v761, %v336
        %v765 = vmax.f32 %v763, 0.0
        %v766 = vmax.f32 %v764, 0.0
        %767 = vst [vmem:[%s334] sm:$0xff] %v765
        %768 = vst [vmem:[%s334 + $0x8] sm:$0xff] %v766
        %s769 = sand.u32 %s207, 1
        %s770 = scalar_lea.sflag [#allocation4], %s769
        %s771 = sand.u32 %s207, 1
        %s772 = smul.addr %s771, 16
        %s773 = scalar_lea.vmem [#allocation7], %s772
        // Predicated region
        $region61: #{tpu_custom_call.1} parent=51 // pred_check
          %p774 = pneg %p217
        $region62: #{tpu_custom_call.1} parent=51 // pred_check_branch
          %776 = sbr.rel (%p774) target = $region64
        $region63: #{tpu_custom_call.1} parent=51 // pred_region
          %s778 = ssub.s32 256, 256
          %779 = vsyncadd %s770, %s778
          %s780 = smul.addr %s26, 2
          %s781 = smul.addr %s780, 128
          %s782 = scalar_lea.hbm %s8, %s781
          %s784 = sshll.u32 %s773, 4
          %s785 = int_to_ptr.vmem [resolvable:$true] %s784
          %787 = dma.vmem_to_hbm [thread:$0]  %s785, 256, %s782, %s770
        $region64: #{tpu_custom_call.1} parent=51 // pred_fallthru
          _
      $region52: #{tpu_custom_call.1} parent=5 // pred_fallthru
        _
      %p788 = scmp.le.s32.totalorder 2, %s21
      // Predicated region
      $region65: #{tpu_custom_call.1} parent=5 // pred_check
        %p789 = pneg %p788
      $region66: #{tpu_custom_call.1} parent=5 // pred_check_branch
        %791 = sbr.rel (%p789) target = $region68
      $region67: #{tpu_custom_call.1} parent=5 // pred_region
        %s792 = ssub.s32 %s21, 2
        // Predicated region
        $region69: #{tpu_custom_call.1} parent=67 // pred_check
          %p793 = pneg %p223
        $region70: #{tpu_custom_call.1} parent=67 // pred_check_branch
          %795 = sbr.rel (%p793) target = $region72
        $region71: #{tpu_custom_call.1} parent=67 // pred_region
          %s796 = sand.u32 %s208, 1
          %s797 = scalar_lea.sflag [#allocation4], %s796
          %s798 = sand.u32 %s208, 1
          %s799 = smul.addr %s798, 16
          %s800 = scalar_lea.vmem [#allocation7], %s799
          %801 = dma.done %s797, 256
        $region72: #{tpu_custom_call.1} parent=67 // pred_fallthru
          _
      $region68: #{tpu_custom_call.1} parent=5 // pred_fallthru
        _
    $region6: #{tpu_custom_call.1} parent=1 // loop_footer
      %s25 = sadd.s32 1, %s21
    $region7: #{tpu_custom_call.1} parent=1 // loop_footer_branch
      %20 = sbr.rel target = $region3
    $region8: #{tpu_custom_call.1} parent=1 // loop_exit
      _
    %802 = vsyncpa [#allocation3], 1
    %s803 = scalar_lea.sflag [#allocation3], 1
    %804 = vsyncpa %s803, 1
    %805 = vsyncpa [#allocation6], 1
    %806 = vsyncpa [#allocation4], 1
    %s807 = scalar_lea.sflag [#allocation4], 1
    %808 = vsyncpa %s807, 1

// kernel: tpu_custom_call.1
$region0: #{tpu_custom_call.1}
  #allocation0 [shape = 'u32[]', space=smem, size = 0x4, offset = 0x4, fixed_abs, tag = 'smem constant byte address 0x4 - core index']
  #allocation1 [shape = 'u32[144,128]{1,0:T(1,128)}', space=vmem, size = 0x12000, scoped, tag = 'internal scratch']
  %s0 = inlined_call_operand.hbm [shape: f32[2,8,256], index: 0, kind: input, shape index: {}]
  %s1 = inlined_call_operand.vmem [shape: f32[8,8], index: 1, kind: input, shape index: {}]
  %s2 = inlined_call_operand.vmem [shape: f32[8,1], index: 2, kind: input, shape index: {}]
  %s3 = inlined_call_operand.vmem [shape: f32[8,72], index: 3, kind: input, shape index: {}]
  %s4 = inlined_call_operand.vmem [shape: f32[8,1], index: 4, kind: input, shape index: {}]
  %s5 = inlined_call_operand.hbm [shape: f32[8,8], index: 5, kind: input, shape index: {}]
  %s6 = inlined_call_operand.vmem [shape: f32[8,1], index: 6, kind: input, shape index: {}]
  %s7 = inlined_call_operand.vmem [shape: f32[9,256], index: 7, kind: input, shape index: {}]
  %s8 = inlined_call_operand.hbm [shape: f32[2,8,256], index: 8, kind: output, shape index: {}]
  %s9 = sld [smem:[#allocation0]]
  $region73: #{tpu_custom_call.1} parent=0
    _
  %s11 = ssub.s32 1, %s9
  %s12 = scalar_select 0, %s11, %s9
  $region1: #{tpu_custom_call.1} parent=0
    #allocation2 [shape = 'u8[16384]{0}', space=vmem, size = 0x4000, scoped, tag = 'input window, operand 0']
    #allocation3 [shape = 's32[2]{0}', space=sflag, size = 0x8, scoped, tag = 'scoped memory for tpu_custom_call.1']
    #allocation4 [shape = 's32[2]{0}', space=sflag, size = 0x8, scoped, tag = 'scoped memory for tpu_custom_call.1']
    #allocation5 [shape = 'u8[4096]{0}', space=vmem, size = 0x1000, scoped, tag = 'input window, operand 5, single buffered']
    #allocation6 [shape = 's32[1]{0}', space=sflag, size = 0x4, scoped, tag = 'scoped memory for tpu_custom_call.1']
    #allocation7 [shape = 'u8[16384]{0}', space=vmem, size = 0x4000, scoped, tag = 'output window, operand 0']
    %13 = vsyncpa [#allocation3], 0
    %s14 = scalar_lea.sflag [#allocation3], 1
    %15 = vsyncpa %s14, 0
    %16 = vsyncpa [#allocation6], 0
    %17 = vsyncpa [#allocation4], 0
    %s18 = scalar_lea.sflag [#allocation4], 1
    %19 = vsyncpa %s18, 0
    loop: start=0, step=1, limit=4
    $region2: #{tpu_custom_call.1} parent=1 // loop_pre_header
      _
    $region3: #{tpu_custom_call.1} parent=1 // loop_header
      %s21 = sphi 0, %s25
      %p22 = scmp.ge.s32.totalorder %s21, 4
      %s31 = sphi 0, %s33
      %s34 = sphi 0, %s31
      %s35 = sphi 0, %s34
      %s51 = sphi 0, %s35
      %s55 = sphi 0, %s55
      %s57 = sphi 0, %s55
      %s58 = sphi 0, %s57
      %s72 = sphi 0, %s58
      %s76 = sphi 0, %s76
      %s78 = sphi 0, %s76
      %s79 = sphi 0, %s78
      %s93 = sphi 0, %s79
      %s97 = sphi 0, %s97
      %s99 = sphi 0, %s97
      %s100 = sphi 0, %s99
      %s114 = sphi 0, %s100
      %s118 = sphi 0, %s118
      %s120 = sphi 0, %s118
      %s121 = sphi 0, %s120
      %s135 = sphi 0, %s121
      %s139 = sphi 0, %s139
      %s141 = sphi 0, %s139
      %s142 = sphi 0, %s141
      %s156 = sphi 0, %s142
      %s160 = sphi 0, %s160
      %s162 = sphi 0, %s160
      %s163 = sphi 0, %s162
      %s177 = sphi 0, %s163
      %s181 = sphi 0, %s181
      %s183 = sphi 0, %s181
      %s184 = sphi 0, %s183
      %s198 = sphi 0, %s184
      %s204 = sphi 0, %s206
      %s207 = sphi 0, %s204
      %s208 = sphi 0, %s207
      %s224 = sphi 0, %s208
    $region4: #{tpu_custom_call.1} parent=1 // loop_header_branch
      %24 = sbr.rel (%p22) target = $region8
    $region5: #{tpu_custom_call.1} parent=1 // loop_body
      %s26 = ssub.s32 %s21, 1
      %s27 = ssub.s32 %s21, 2
      %s28 = sadd.s32 %s21, 1
      %s29 = ssub.s32 %s21, %s28
      %p30 = scmp.eq.s32.totalorder %s29, 0
      %s32 = sadd.s32 %s31, 1
      %s33 = scalar_select %p30, %s31, %s32
      %p36 = pneg %p30
      %p37 = scmp.eq.s32.totalorder %s21, 1
      %p38 = por %p36, %p37
      %p39 = scmp.ne.s32.totalorder %s31, %s34
      %p40 = scmp.eq.s32.totalorder %s21, 0
      %p41 = por %p39, %p40
      %p42 = scmp.ne.s32.totalorder %s31, %s34
      %p43 = scmp.eq.s32.totalorder %s26, 1
      %p44 = por %p42, %p43
      %p45 = scmp.ne.s32.totalorder %s34, %s35
      %p46 = scmp.eq.s32.totalorder %s26, 0
      %p47 = por %p45, %p46
      %p48 = scmp.ne.s32.totalorder %s34, %s35
      %p49 = scmp.eq.s32.totalorder %s27, 1
      %p50 = por %p48, %p49
      %p52 = scmp.ne.s32.totalorder %s35, %s51
      %p53 = scmp.eq.s32.totalorder %s27, 0
      %p54 = por %p52, %p53
      %s56 = sadd.s32 %s55, 1
      %p59 = scmp.eq.s32.totalorder %s21, 1
      %p60 = scmp.ne.s32.totalorder %s55, %s57
      %p61 = scmp.eq.s32.totalorder %s21, 0
      %p62 = por %p60, %p61
      %p63 = scmp.ne.s32.totalorder %s55, %s57
      %p64 = scmp.eq.s32.totalorder %s26, 1
      %p65 = por %p63, %p64
      %p66 = scmp.ne.s32.totalorder %s57, %s58
      %p67 = scmp.eq.s32.totalorder %s26, 0
      %p68 = por %p66, %p67
      %p69 = scmp.ne.s32.totalorder %s57, %s58
      %p70 = scmp.eq.s32.totalorder %s27, 1
      %p71 = por %p69, %p70
      %p73 = scmp.ne.s32.totalorder %s58, %s72
      %p74 = scmp.eq.s32.totalorder %s27, 0
      %p75 = por %p73, %p74
      %s77 = sadd.s32 %s76, 1
      %p80 = scmp.eq.s32.totalorder %s21, 1
      %p81 = scmp.ne.s32.totalorder %s76, %s78
      %p82 = scmp.eq.s32.totalorder %s21, 0
      %p83 = por %p81, %p82
      %p84 = scmp.ne.s32.totalorder %s76, %s78
      %p85 = scmp.eq.s32.totalorder %s26, 1
      %p86 = por %p84, %p85
      %p87 = scmp.ne.s32.totalorder %s78, %s79
      %p88 = scmp.eq.s32.totalorder %s26, 0
      %p89 = por %p87, %p88
      %p90 = scmp.ne.s32.totalorder %s78, %s79
      %p91 = scmp.eq.s32.totalorder %s27, 1
      %p92 = por %p90, %p91
      %p94 = scmp.ne.s32.totalorder %s79, %s93
      %p95 = scmp.eq.s32.totalorder %s27, 0
      %p96 = por %p94, %p95
      %s98 = sadd.s32 %s97, 1
      %p101 = scmp.eq.s32.totalorder %s21, 1
      %p102 = scmp.ne.s32.totalorder %s97, %s99
      %p103 = scmp.eq.s32.totalorder %s21, 0
      %p104 = por %p102, %p103
      %p105 = scmp.ne.s32.totalorder %s97, %s99
      %p106 = scmp.eq.s32.totalorder %s26, 1
      %p107 = por %p105, %p106
      %p108 = scmp.ne.s32.totalorder %s99, %s100
      %p109 = scmp.eq.s32.totalorder %s26, 0
      %p110 = por %p108, %p109
      %p111 = scmp.ne.s32.totalorder %s99, %s100
      %p112 = scmp.eq.s32.totalorder %s27, 1
      %p113 = por %p111, %p112
      %p115 = scmp.ne.s32.totalorder %s100, %s114
      %p116 = scmp.eq.s32.totalorder %s27, 0
      %p117 = por %p115, %p116
      %s119 = sadd.s32 %s118, 1
      %p122 = scmp.eq.s32.totalorder %s21, 1
      %p123 = scmp.ne.s32.totalorder %s118, %s120
      %p124 = scmp.eq.s32.totalorder %s21, 0
      %p125 = por %p123, %p124
      %p126 = scmp.ne.s32.totalorder %s118, %s120
      %p127 = scmp.eq.s32.totalorder %s26, 1
      %p128 = por %p126, %p127
      %p129 = scmp.ne.s32.totalorder %s120, %s121
      %p130 = scmp.eq.s32.totalorder %s26, 0
      %p131 = por %p129, %p130
      %p132 = scmp.ne.s32.totalorder %s120, %s121
      %p133 = scmp.eq.s32.totalorder %s27, 1
      %p134 = por %p132, %p133
      %p136 = scmp.ne.s32.totalorder %s121, %s135
      %p137 = scmp.eq.s32.totalorder %s27, 0
      %p138 = por %p136, %p137
      %s140 = sadd.s32 %s139, 1
      %p143 = scmp.eq.s32.totalorder %s21, 1
      %p144 = scmp.ne.s32.totalorder %s139, %s141
      %p145 = scmp.eq.s32.totalorder %s21, 0
      %p146 = por %p144, %p145
      %p147 = scmp.ne.s32.totalorder %s139, %s141
      %p148 = scmp.eq.s32.totalorder %s26, 1
      %p149 = por %p147, %p148
      %p150 = scmp.ne.s32.totalorder %s141, %s142
      %p151 = scmp.eq.s32.totalorder %s26, 0
      %p152 = por %p150, %p151
      %p153 = scmp.ne.s32.totalorder %s141, %s142
      %p154 = scmp.eq.s32.totalorder %s27, 1
      %p155 = por %p153, %p154
      %p157 = scmp.ne.s32.totalorder %s142, %s156
      %p158 = scmp.eq.s32.totalorder %s27, 0
      %p159 = por %p157, %p158
      %s161 = sadd.s32 %s160, 1
      %p164 = scmp.eq.s32.totalorder %s21, 1
      %p165 = scmp.ne.s32.totalorder %s160, %s162
      %p166 = scmp.eq.s32.totalorder %s21, 0
      %p167 = por %p165, %p166
      %p168 = scmp.ne.s32.totalorder %s160, %s162
      %p169 = scmp.eq.s32.totalorder %s26, 1
      %p170 = por %p168, %p169
      %p171 = scmp.ne.s32.totalorder %s162, %s163
      %p172 = scmp.eq.s32.totalorder %s26, 0
      %p173 = por %p171, %p172
      %p174 = scmp.ne.s32.totalorder %s162, %s163
      %p175 = scmp.eq.s32.totalorder %s27, 1
      %p176 = por %p174, %p175
      %p178 = scmp.ne.s32.totalorder %s163, %s177
      %p179 = scmp.eq.s32.totalorder %s27, 0
      %p180 = por %p178, %p179
      %s182 = sadd.s32 %s181, 1
      %p185 = scmp.eq.s32.totalorder %s21, 1
      %p186 = scmp.ne.s32.totalorder %s181, %s183
      %p187 = scmp.eq.s32.totalorder %s21, 0
      %p188 = por %p186, %p187
      %p189 = scmp.ne.s32.totalorder %s181, %s183
      %p190 = scmp.eq.s32.totalorder %s26, 1
      %p191 = por %p189, %p190
      %p192 = scmp.ne.s32.totalorder %s183, %s184
      %p193 = scmp.eq.s32.totalorder %s26, 0
      %p194 = por %p192, %p193
      %p195 = scmp.ne.s32.totalorder %s183, %s184
      %p196 = scmp.eq.s32.totalorder %s27, 1
      %p197 = por %p195, %p196
      %p199 = scmp.ne.s32.totalorder %s184, %s198
      %p200 = scmp.eq.s32.totalorder %s27, 0
      %p201 = por %p199, %p200
      %s202 = ssub.s32 %s21, %s28
      %p203 = scmp.eq.s32.totalorder %s202, 0
      %s205 = sadd.s32 %s204, 1
      %s206 = scalar_select %p203, %s204, %s205
      %p209 = pneg %p203
      %p210 = scmp.eq.s32.totalorder %s21, 1
      %p211 = por %p209, %p210
      %p212 = scmp.ne.s32.totalorder %s204, %s207
      %p213 = scmp.eq.s32.totalorder %s21, 0
      %p214 = por %p212, %p213
      %p215 = scmp.ne.s32.totalorder %s204, %s207
      %p216 = scmp.eq.s32.totalorder %s26, 1
      %p217 = por %p215, %p216
      %p218 = scmp.ne.s32.totalorder %s207, %s208
      %p219 = scmp.eq.s32.totalorder %s26, 0
      %p220 = por %p218, %p219
      %p221 = scmp.ne.s32.totalorder %s207, %s208
      %p222 = scmp.eq.s32.totalorder %s27, 1
      %p223 = por %p221, %p222
      %p225 = scmp.ne.s32.totalorder %s208, %s224
      %p226 = scmp.eq.s32.totalorder %s27, 0
      %p227 = por %p225, %p226
      %p228 = scmp.le.s32.totalorder 1, %s21
      %p229 = scmp.lt.s32.totalorder %s21, 3
      %p230 = pnand %p228, %p229
      %p231 = pneg %p230
      // Predicated region
      $region9: #{tpu_custom_call.1} parent=5 // pred_check
        _
      $region10: #{tpu_custom_call.1} parent=5 // pred_check_branch
        %233 = sbr.rel (%p230) target = $region12
      $region11: #{tpu_custom_call.1} parent=5 // pred_region
        %s234 = ssub.s32 %s21, 1
        // Predicated region
        $region13: #{tpu_custom_call.1} parent=11 // pred_check
          %p235 = pneg %p68
        $region14: #{tpu_custom_call.1} parent=11 // pred_check_branch
          %237 = sbr.rel (%p235) target = $region16
        $region15: #{tpu_custom_call.1} parent=11 // pred_region
          _
        $region16: #{tpu_custom_call.1} parent=11 // pred_fallthru
          _
        // Predicated region
        $region17: #{tpu_custom_call.1} parent=11 // pred_check
          %p238 = pneg %p89
        $region18: #{tpu_custom_call.1} parent=11 // pred_check_branch
          %240 = sbr.rel (%p238) target = $region20
        $region19: #{tpu_custom_call.1} parent=11 // pred_region
          _
        $region20: #{tpu_custom_call.1} parent=11 // pred_fallthru
          _
        // Predicated region
        $region21: #{tpu_custom_call.1} parent=11 // pred_check
          %p241 = pneg %p110
        $region22: #{tpu_custom_call.1} parent=11 // pred_check_branch
          %243 = sbr.rel (%p241) target = $region24
        $region23: #{tpu_custom_call.1} parent=11 // pred_region
          _
        $region24: #{tpu_custom_call.1} parent=11 // pred_fallthru
          _
        // Predicated region
        $region25: #{tpu_custom_call.1} parent=11 // pred_check
          %p244 = pneg %p131
        $region26: #{tpu_custom_call.1} parent=11 // pred_check_branch
          %246 = sbr.rel (%p244) target = $region28
        $region27: #{tpu_custom_call.1} parent=11 // pred_region
          _
        $region28: #{tpu_custom_call.1} parent=11 // pred_fallthru
          _
        // Predicated region
        $region29: #{tpu_custom_call.1} parent=11 // pred_check
          %p247 = pneg %p152
        $region30: #{tpu_custom_call.1} parent=11 // pred_check_branch
          %249 = sbr.rel (%p247) target = $region32
        $region31: #{tpu_custom_call.1} parent=11 // pred_region
          %s251 = ssub.s32 128, 128
          %252 = vsyncadd [#allocation6], %s251
          %s254 = sshll.u32 [#allocation5], 4
          %s255 = int_to_ptr.vmem [resolvable:$true] %s254
          %257 = dma.hbm_to_vmem [thread:$0]  %s5, 128, %s255, [#allocation6]
        $region32: #{tpu_custom_call.1} parent=11 // pred_fallthru
          _
        // Predicated region
        $region33: #{tpu_custom_call.1} parent=11 // pred_check
          %p258 = pneg %p173
        $region34: #{tpu_custom_call.1} parent=11 // pred_check_branch
          %260 = sbr.rel (%p258) target = $region36
        $region35: #{tpu_custom_call.1} parent=11 // pred_region
          _
        $region36: #{tpu_custom_call.1} parent=11 // pred_fallthru
          _
        // Predicated region
        $region37: #{tpu_custom_call.1} parent=11 // pred_check
          %p261 = pneg %p194
        $region38: #{tpu_custom_call.1} parent=11 // pred_check_branch
          %263 = sbr.rel (%p261) target = $region40
        $region39: #{tpu_custom_call.1} parent=11 // pred_region
          _
        $region40: #{tpu_custom_call.1} parent=11 // pred_fallthru
          _
      $region12: #{tpu_custom_call.1} parent=5 // pred_fallthru
        _
      %p264 = scmp.lt.s32.totalorder %s21, 2
      // Predicated region
      $region41: #{tpu_custom_call.1} parent=5 // pred_check
        %p265 = pneg %p264
      $region42: #{tpu_custom_call.1} parent=5 // pred_check_branch
        %267 = sbr.rel (%p265) target = $region44
      $region43: #{tpu_custom_call.1} parent=5 // pred_region
        // Predicated region
        $region45: #{tpu_custom_call.1} parent=43 // pred_check
          %p268 = pneg %p41
        $region46: #{tpu_custom_call.1} parent=43 // pred_check_branch
          %270 = sbr.rel (%p268) target = $region48
        $region47: #{tpu_custom_call.1} parent=43 // pred_region
          %s271 = sand.u32 %s31, 1
          %s272 = scalar_lea.sflag [#allocation3], %s271
          %s273 = sand.u32 %s31, 1
          %s274 = smul.addr %s273, 16
          %s275 = scalar_lea.vmem [#allocation2], %s274
          %s277 = ssub.s32 256, 256
          %278 = vsyncadd %s272, %s277
          %s279 = smul.addr %s21, 2
          %s280 = smul.addr %s279, 128
          %s281 = scalar_lea.hbm %s0, %s280
          %s283 = sshll.u32 %s275, 4
          %s284 = int_to_ptr.vmem [resolvable:$true] %s283
          %286 = dma.hbm_to_vmem [thread:$0]  %s281, 256, %s284, %s272
        $region48: #{tpu_custom_call.1} parent=43 // pred_fallthru
          _
      $region44: #{tpu_custom_call.1} parent=5 // pred_fallthru
        _
      %p287 = scmp.le.s32.totalorder 1, %s21
      %p288 = scmp.lt.s32.totalorder %s21, 3
      %p289 = pnand %p287, %p288
      %p290 = pneg %p289
      // Predicated region
      $region49: #{tpu_custom_call.1} parent=5 // pred_check
        _
      $region50: #{tpu_custom_call.1} parent=5 // pred_check_branch
        %292 = sbr.rel (%p289) target = $region52
      $region51: #{tpu_custom_call.1} parent=5 // pred_region
        %s293 = ssub.s32 %s21, 1
        %s294 = sand.u32 %s34, 1
        %s295 = scalar_lea.sflag [#allocation3], %s294
        %s296 = sand.u32 %s34, 1
        %s297 = smul.addr %s296, 16
        %s298 = scalar_lea.vmem [#allocation2], %s297
        // Predicated region
        $region53: #{tpu_custom_call.1} parent=51 // pred_check
          %p299 = pneg %p47
        $region54: #{tpu_custom_call.1} parent=51 // pred_check_branch
          %301 = sbr.rel (%p299) target = $region56
        $region55: #{tpu_custom_call.1} parent=51 // pred_region
          %302 = dma.done %s295, 256
        $region56: #{tpu_custom_call.1} parent=51 // pred_fallthru
          _
        // Predicated region
        $region57: #{tpu_custom_call.1} parent=51 // pred_check
          %p303 = pneg %p152
        $region58: #{tpu_custom_call.1} parent=51 // pred_check_branch
          %305 = sbr.rel (%p303) target = $region60
        $region59: #{tpu_custom_call.1} parent=51 // pred_region
          %306 = dma.done [#allocation6], 128
        $region60: #{tpu_custom_call.1} parent=51 // pred_fallthru
          _
        %s307 = sand.u32 %s34, 1
        %s308 = scalar_lea.sflag [#allocation3], %s307
        %s309 = sand.u32 %s34, 1
        %s310 = smul.addr %s309, 16
        %s311 = scalar_lea.vmem [#allocation2], %s310
        %p312 = pneg %p47
        %p313 = pneg %p44
        %p314 = pneg %p68
        %p315 = pneg %p65
        %p316 = pneg %p89
        %p317 = pneg %p86
        %p318 = pneg %p110
        %p319 = pneg %p107
        %p320 = pneg %p131
        %p321 = pneg %p128
        %p322 = pneg %p152
        %p323 = pneg %p149
        %p324 = pneg %p173
        %p325 = pneg %p170
        %p326 = pneg %p194
        %p327 = pneg %p191
        %p328 = pneg %p220
        %p329 = pneg %p217
        %s330 = sand.u32 %s207, 1
        %s331 = scalar_lea.sflag [#allocation4], %s330
        %s332 = sand.u32 %s207, 1
        %s333 = smul.addr %s332, 16
        %s334 = scalar_lea.vmem [#allocation7], %s333
        %v335 = vld [vmem:[%s298] sm:$0xff]
        %v336 = vld [vmem:[%s298 + $0x8] sm:$0xff]
        %v337 = vld [vmem:[%s1] sm:$0xff]
        %v338 = vld [vmem:[%s2] sm:$0xff]
        %340 = vset.pattern.permute.xlu0 0
        %341 = vperm.xlu0 %340, %v338
        %v342 = vpop.permute.xlu0 %341
        %vm344 = vcmask 64512
        %v346 = vsel %vm344, %v337, 0
        %348 = vmatprep.subr.mxu0 %v336
        %349 = vmatpush1.msra.mxu0 %v335
        %350 = vmatprep.subr.mxu0 0.0
        %351 = vmatpush1.msra.mxu0 0.0
        %352 = vmatprep.subr.mxu0 0.0
        %353 = vmatpush1.msra.mxu0 0.0
        %354 = vmatprep.subr.mxu0 0.0
        %355 = vmatpush1.msra.mxu0 0.0
        %356 = vmatprep.subr.mxu0 0.0
        %357 = vmatpush1.msra.mxu0 0.0
        %358 = vmatprep.subr.mxu0 0.0
        %359 = vmatpush1.msra.mxu0 0.0
        %360 = vmatprep.subr.mxu0 0.0
        %361 = vmatpush1.msra.mxu0 0.0
        %362 = vmatprep.subr.mxu0 0.0
        %363 = vmatpush1.msra.mxu0 0.0
        %364 = vmatprep.subr.mxu0 0.0
        %365 = vmatpush1.msra.mxu0 0.0
        %366 = vmatprep.subr.mxu0 0.0
        %367 = vmatpush1.msra.mxu0 0.0
        %368 = vmatprep.subr.mxu0 0.0
        %369 = vmatpush1.msra.mxu0 0.0
        %370 = vmatprep.subr.mxu0 0.0
        %371 = vmatpush1.msra.mxu0 0.0
        %372 = vmatprep.subr.mxu0 0.0
        %373 = vmatpush1.msra.mxu0 0.0
        %374 = vmatprep.subr.mxu0 0.0
        %375 = vmatpush1.msra.mxu0 0.0
        %376 = vmatprep.subr.mxu0 0.0
        %377 = vmatpush1.msra.mxu0 0.0
        %378 = vmatprep.subr.mxu0 0.0
        %379 = vmatpush1.msra.mxu0 0.0
        %380 = vmatprep.subr.mxu0 0.0
        %381 = vmatpush1.msra.mxu0 0.0
        %382 = vmatprep.subr.mxu0 0.0
        %383 = vmatpush1.msra.mxu0 0.0
        %384 = vmatprep.subr.mxu0 0.0
        %385 = vmatpush1.msra.mxu0 0.0
        %386 = vmatprep.subr.mxu0 0.0
        %387 = vmatpush1.msra.mxu0 0.0
        %388 = vmatprep.subr.mxu0 0.0
        %389 = vmatpush1.msra.mxu0 0.0
        %390 = vmatprep.subr.mxu0 0.0
        %391 = vmatpush1.msra.mxu0 0.0
        %392 = vmatprep.subr.mxu0 0.0
        %393 = vmatpush1.msra.mxu0 0.0
        %394 = vmatprep.subr.mxu0 0.0
        %395 = vmatpush1.msra.mxu0 0.0
        %396 = vmatprep.subr.mxu0 0.0
        %397 = vmatpush1.msra.mxu0 0.0
        %398 = vmatprep.subr.mxu0 0.0
        %399 = vmatpush1.msra.mxu0 0.0
        %400 = vmatprep.subr.mxu0 0.0
        %401 = vmatpush1.msra.mxu0 0.0
        %402 = vmatprep.subr.mxu0 0.0
        %403 = vmatpush1.msra.mxu0 0.0
        %404 = vmatprep.subr.mxu0 0.0
        %405 = vmatpush1.msra.mxu0 0.0
        %406 = vmatprep.subr.mxu0 0.0
        %407 = vmatpush1.msra.mxu0 0.0
        %408 = vmatprep.subr.mxu0 0.0
        %409 = vmatpush1.msra.mxu0 0.0
        %410 = vmatprep.subr.mxu0 0.0
        %411 = vmatpush1.msra.mxu0 0.0
        %412 = vmatprep.mubr.f32.mxu0 0.0
        %413 = vmatmul.mubr.f32.gmra.mrb[0].mxu0 %v346
        %v414 = vpop.f32.mrb[0].mxu0
        %v415 = vadd.f32 %v342, %v414
        %v416 = vpop.f32.mrb[0].mxu0
        %v417 = vadd.f32 %v342, %v416
        %418 = vdwg.mxu0
        %v419 = vmax.f32 %v415, 0.0
        %v420 = vmax.f32 %v417, 0.0
        %421 = vrot.lane.b32.xlu0 %v419, 17
        %v422 = vpop.permute.xlu0 %421
        %423 = vrot.lane.b32.xlu0 %v420, 17
        %v424 = vpop.permute.xlu0 %423
        %v425 = vlaneseq
        %v426 = vand.u32 %v425, 127
        %vm427 = vcmp.lt.s32.totalorder %v426, 17
        %v428 = vsel %vm427, %v422, %v424
        %v429 = vsel %vm427, %v424, %v422
        %v430 = vld [vmem:[%s7] ss:$8 sm:$0x3]
        %v432 = vlaneseq
        %v433 = vshrl.u32 %v432, 7
        %v434 = vsub.s32 0, %v433
        %v435 = vrot.slane %v430, %v434
        %v436 = vlaneseq
        %v437 = vshrl.u32 %v436, 7
        %v438 = vsub.s32 1, %v437
        %v439 = vrot.slane %v430, %v438
        %v442 = vmul.f32 %v429, %v435
        %v443 = vmul.f32 %v428, %v439
        %444 = vrot.lane.b32.xlu0 %v419, 16
        %v445 = vpop.permute.xlu0 %444
        %446 = vrot.lane.b32.xlu0 %v420, 16
        %v447 = vpop.permute.xlu0 %446
        %vm448 = vcmp.lt.s32.totalorder %v426, 16
        %v449 = vsel %vm448, %v445, %v447
        %v450 = vsel %vm448, %v447, %v445
        %s451 = scalar_lea.vmem %s7, 1
        %v452 = vld [vmem:[%s451] ss:$8 sm:$0x3]
        %v454 = vlaneseq
        %v455 = vshrl.u32 %v454, 7
        %v456 = vsub.s32 0, %v455
        %v457 = vrot.slane %v452, %v456
        %v458 = vlaneseq
        %v459 = vshrl.u32 %v458, 7
        %v460 = vsub.s32 1, %v459
        %v461 = vrot.slane %v452, %v460
        %v464 = vmul.f32 %v450, %v457
        %v465 = vmul.f32 %v449, %v461
        %466 = vrot.lane.b32.xlu0 %v419, 15
        %v467 = vpop.permute.xlu0 %466
        %468 = vrot.lane.b32.xlu0 %v420, 15
        %v469 = vpop.permute.xlu0 %468
        %vm470 = vcmp.lt.s32.totalorder %v426, 15
        %v471 = vsel %vm470, %v467, %v469
        %v472 = vsel %vm470, %v469, %v467
        %s473 = scalar_lea.vmem %s7, 2
        %v474 = vld [vmem:[%s473] ss:$8 sm:$0x3]
        %v476 = vlaneseq
        %v477 = vshrl.u32 %v476, 7
        %v478 = vsub.s32 0, %v477
        %v479 = vrot.slane %v474, %v478
        %v480 = vlaneseq
        %v481 = vshrl.u32 %v480, 7
        %v482 = vsub.s32 1, %v481
        %v483 = vrot.slane %v474, %v482
        %v486 = vmul.f32 %v472, %v479
        %v487 = vmul.f32 %v471, %v483
        %488 = vrot.lane.b32.xlu0 %v419, 1
        %v489 = vpop.permute.xlu0 %488
        %490 = vrot.lane.b32.xlu0 %v420, 1
        %v491 = vpop.permute.xlu0 %490
        %vm492 = vcmp.lt.s32.totalorder %v426, 1
        %v493 = vsel %vm492, %v489, %v491
        %v494 = vsel %vm492, %v491, %v489
        %s495 = scalar_lea.vmem %s7, 3
        %v496 = vld [vmem:[%s495] ss:$8 sm:$0x3]
        %v498 = vlaneseq
        %v499 = vshrl.u32 %v498, 7
        %v500 = vsub.s32 0, %v499
        %v501 = vrot.slane %v496, %v500
        %v502 = vlaneseq
        %v503 = vshrl.u32 %v502, 7
        %v504 = vsub.s32 1, %v503
        %v505 = vrot.slane %v496, %v504
        %v508 = vmul.f32 %v494, %v501
        %v509 = vmul.f32 %v493, %v505
        %510 = vrot.lane.b32.xlu0 %v419, 127
        %v511 = vpop.permute.xlu0 %510
        %512 = vrot.lane.b32.xlu0 %v420, 127
        %v513 = vpop.permute.xlu0 %512
        %vm514 = vcmp.lt.s32.totalorder %v426, 127
        %v515 = vsel %vm514, %v511, %v513
        %v516 = vsel %vm514, %v513, %v511
        %s517 = scalar_lea.vmem %s7, 5
        %v518 = vld [vmem:[%s517] ss:$8 sm:$0x3]
        %v520 = vlaneseq
        %v521 = vshrl.u32 %v520, 7
        %v522 = vsub.s32 0, %v521
        %v523 = vrot.slane %v518, %v522
        %v524 = vlaneseq
        %v525 = vshrl.u32 %v524, 7
        %v526 = vsub.s32 1, %v525
        %v527 = vrot.slane %v518, %v526
        %v530 = vmul.f32 %v515, %v523
        %v531 = vmul.f32 %v516, %v527
        %532 = vrot.lane.b32.xlu0 %v419, 113
        %v533 = vpop.permute.xlu0 %532
        %534 = vrot.lane.b32.xlu0 %v420, 113
        %v535 = vpop.permute.xlu0 %534
        %vm536 = vcmp.lt.s32.totalorder %v426, 113
        %v537 = vsel %vm536, %v533, %v535
        %v538 = vsel %vm536, %v535, %v533
        %s539 = scalar_lea.vmem %s7, 6
        %v540 = vld [vmem:[%s539] ss:$8 sm:$0x3]
        %v542 = vlaneseq
        %v543 = vshrl.u32 %v542, 7
        %v544 = vsub.s32 0, %v543
        %v545 = vrot.slane %v540, %v544
        %v546 = vlaneseq
        %v547 = vshrl.u32 %v546, 7
        %v548 = vsub.s32 1, %v547
        %v549 = vrot.slane %v540, %v548
        %v552 = vmul.f32 %v537, %v545
        %v553 = vmul.f32 %v538, %v549
        %554 = vrot.lane.b32.xlu0 %v419, 112
        %v555 = vpop.permute.xlu0 %554
        %556 = vrot.lane.b32.xlu0 %v420, 112
        %v557 = vpop.permute.xlu0 %556
        %vm558 = vcmp.lt.s32.totalorder %v426, 112
        %v559 = vsel %vm558, %v555, %v557
        %v560 = vsel %vm558, %v557, %v555
        %s561 = scalar_lea.vmem %s7, 7
        %v562 = vld [vmem:[%s561] ss:$8 sm:$0x3]
        %v564 = vlaneseq
        %v565 = vshrl.u32 %v564, 7
        %v566 = vsub.s32 0, %v565
        %v567 = vrot.slane %v562, %v566
        %v568 = vlaneseq
        %v569 = vshrl.u32 %v568, 7
        %v570 = vsub.s32 1, %v569
        %v571 = vrot.slane %v562, %v570
        %v574 = vmul.f32 %v559, %v567
        %v575 = vmul.f32 %v560, %v571
        %576 = vrot.lane.b32.xlu0 %v419, 111
        %v577 = vpop.permute.xlu0 %576
        %578 = vrot.lane.b32.xlu0 %v420, 111
        %v579 = vpop.permute.xlu0 %578
        %vm580 = vcmp.lt.s32.totalorder %v426, 111
        %v581 = vsel %vm580, %v577, %v579
        %v582 = vsel %vm580, %v579, %v577
        %s583 = scalar_lea.vmem %s7, 16
        %v584 = vld [vmem:[%s583] ss:$8 sm:$0x3]
        %v586 = vlaneseq
        %v587 = vshrl.u32 %v586, 7
        %v588 = vsub.s32 0, %v587
        %v589 = vrot.slane %v584, %v588
        %v590 = vlaneseq
        %v591 = vshrl.u32 %v590, 7
        %v592 = vsub.s32 1, %v591
        %v593 = vrot.slane %v584, %v592
        %v596 = vmul.f32 %v581, %v589
        %v597 = vmul.f32 %v582, %v593
        %v598 = vld [vmem:[%s3] sm:$0xff]
        %v599 = vld [vmem:[%s4] sm:$0xff]
        %601 = vset.pattern.permute.xlu0 0
        %602 = vperm.xlu0 %601, %v599
        %v603 = vpop.permute.xlu0 %602
        %vm605 = vcmask 588800
        %v607 = vsel %vm605, %v598, 0
        %609 = vmatprep.subr.mxu0 %v443
        %610 = vmatpush1.msra.mxu0 %v442
        %611 = vmatprep.subr.mxu0 %v465
        %612 = vmatpush1.msra.mxu0 %v464
        %613 = vmatprep.subr.mxu0 %v487
        %614 = vmatpush1.msra.mxu0 %v486
        %615 = vmatprep.subr.mxu0 %v509
        %616 = vmatpush1.msra.mxu0 %v508
        %617 = vmatprep.subr.mxu0 %v420
        %618 = vmatpush1.msra.mxu0 %v419
        %619 = vmatprep.subr.mxu0 %v531
        %620 = vmatpush1.msra.mxu0 %v530
        %621 = vmatprep.subr.mxu0 %v553
        %622 = vmatpush1.msra.mxu0 %v552
        %623 = vmatprep.subr.mxu0 %v575
        %624 = vmatpush1.msra.mxu0 %v574
        %625 = vmatprep.subr.mxu0 %v597
        %626 = vmatpush1.msra.mxu0 %v596
        %627 = vmatprep.subr.mxu0 0.0
        %628 = vmatpush1.msra.mxu0 0.0
        %629 = vmatprep.subr.mxu0 0.0
        %630 = vmatpush1.msra.mxu0 0.0
        %631 = vmatprep.subr.mxu0 0.0
        %632 = vmatpush1.msra.mxu0 0.0
        %633 = vmatprep.subr.mxu0 0.0
        %634 = vmatpush1.msra.mxu0 0.0
        %635 = vmatprep.subr.mxu0 0.0
        %636 = vmatpush1.msra.mxu0 0.0
        %637 = vmatprep.subr.mxu0 0.0
        %638 = vmatpush1.msra.mxu0 0.0
        %639 = vmatprep.subr.mxu0 0.0
        %640 = vmatpush1.msra.mxu0 0.0
        %641 = vmatprep.subr.mxu0 0.0
        %642 = vmatpush1.msra.mxu0 0.0
        %643 = vmatprep.subr.mxu0 0.0
        %644 = vmatpush1.msra.mxu0 0.0
        %645 = vmatprep.subr.mxu0 0.0
        %646 = vmatpush1.msra.mxu0 0.0
        %647 = vmatprep.subr.mxu0 0.0
        %648 = vmatpush1.msra.mxu0 0.0
        %649 = vmatprep.subr.mxu0 0.0
        %650 = vmatpush1.msra.mxu0 0.0
        %651 = vmatprep.subr.mxu0 0.0
        %652 = vmatpush1.msra.mxu0 0.0
        %653 = vmatprep.subr.mxu0 0.0
        %654 = vmatpush1.msra.mxu0 0.0
        %655 = vmatprep.subr.mxu0 0.0
        %656 = vmatpush1.msra.mxu0 0.0
        %657 = vmatprep.subr.mxu0 0.0
        %658 = vmatpush1.msra.mxu0 0.0
        %659 = vmatprep.subr.mxu0 0.0
        %660 = vmatpush1.msra.mxu0 0.0
        %661 = vmatprep.subr.mxu0 0.0
        %662 = vmatpush1.msra.mxu0 0.0
        %663 = vmatprep.subr.mxu0 0.0
        %664 = vmatpush1.msra.mxu0 0.0
        %665 = vmatprep.subr.mxu0 0.0
        %666 = vmatpush1.msra.mxu0 0.0
        %667 = vmatprep.subr.mxu0 0.0
        %668 = vmatpush1.msra.mxu0 0.0
        %669 = vmatprep.subr.mxu0 0.0
        %670 = vmatpush1.msra.mxu0 0.0
        %671 = vmatprep.subr.mxu0 0.0
        %672 = vmatpush1.msra.mxu0 0.0
        %673 = vmatprep.mubr.f32.mxu0 0.0
        %674 = vmatmul.mubr.f32.gmra.mrb[0].mxu0 %v607
        %v675 = vpop.f32.mrb[0].mxu0
        %v676 = vadd.f32 %v603, %v675
        %v677 = vpop.f32.mrb[0].mxu0
        %v678 = vadd.f32 %v603, %v677
        %679 = vdwg.mxu0
        %v680 = vmax.f32 %v676, 0.0
        %v681 = vmax.f32 %v678, 0.0
        %v682 = vld [vmem:[#allocation5] sm:$0xff]
        %v683 = vld [vmem:[%s6] sm:$0xff]
        %685 = vset.pattern.permute.xlu0 0
        %686 = vperm.xlu0 %685, %v683
        %v687 = vpop.permute.xlu0 %686
        %v690 = vsel %vm344, %v682, 0
        %692 = vmatprep.subr.mxu0 %v681
        %693 = vmatpush1.msra.mxu0 %v680
        %694 = vmatprep.subr.mxu0 0.0
        %695 = vmatpush1.msra.mxu0 0.0
        %696 = vmatprep.subr.mxu0 0.0
        %697 = vmatpush1.msra.mxu0 0.0
        %698 = vmatprep.subr.mxu0 0.0
        %699 = vmatpush1.msra.mxu0 0.0
        %700 = vmatprep.subr.mxu0 0.0
        %701 = vmatpush1.msra.mxu0 0.0
        %702 = vmatprep.subr.mxu0 0.0
        %703 = vmatpush1.msra.mxu0 0.0
        %704 = vmatprep.subr.mxu0 0.0
        %705 = vmatpush1.msra.mxu0 0.0
        %706 = vmatprep.subr.mxu0 0.0
        %707 = vmatpush1.msra.mxu0 0.0
        %708 = vmatprep.subr.mxu0 0.0
        %709 = vmatpush1.msra.mxu0 0.0
        %710 = vmatprep.subr.mxu0 0.0
        %711 = vmatpush1.msra.mxu0 0.0
        %712 = vmatprep.subr.mxu0 0.0
        %713 = vmatpush1.msra.mxu0 0.0
        %714 = vmatprep.subr.mxu0 0.0
        %715 = vmatpush1.msra.mxu0 0.0
        %716 = vmatprep.subr.mxu0 0.0
        %717 = vmatpush1.msra.mxu0 0.0
        %718 = vmatprep.subr.mxu0 0.0
        %719 = vmatpush1.msra.mxu0 0.0
        %720 = vmatprep.subr.mxu0 0.0
        %721 = vmatpush1.msra.mxu0 0.0
        %722 = vmatprep.subr.mxu0 0.0
        %723 = vmatpush1.msra.mxu0 0.0
        %724 = vmatprep.subr.mxu0 0.0
        %725 = vmatpush1.msra.mxu0 0.0
        %726 = vmatprep.subr.mxu0 0.0
        %727 = vmatpush1.msra.mxu0 0.0
        %728 = vmatprep.subr.mxu0 0.0
        %729 = vmatpush1.msra.mxu0 0.0
        %730 = vmatprep.subr.mxu0 0.0
        %731 = vmatpush1.msra.mxu0 0.0
        %732 = vmatprep.subr.mxu0 0.0
        %733 = vmatpush1.msra.mxu0 0.0
        %734 = vmatprep.subr.mxu0 0.0
        %735 = vmatpush1.msra.mxu0 0.0
        %736 = vmatprep.subr.mxu0 0.0
        %737 = vmatpush1.msra.mxu0 0.0
        %738 = vmatprep.subr.mxu0 0.0
        %739 = vmatpush1.msra.mxu0 0.0
        %740 = vmatprep.subr.mxu0 0.0
        %741 = vmatpush1.msra.mxu0 0.0
        %742 = vmatprep.subr.mxu0 0.0
        %743 = vmatpush1.msra.mxu0 0.0
        %744 = vmatprep.subr.mxu0 0.0
        %745 = vmatpush1.msra.mxu0 0.0
        %746 = vmatprep.subr.mxu0 0.0
        %747 = vmatpush1.msra.mxu0 0.0
        %748 = vmatprep.subr.mxu0 0.0
        %749 = vmatpush1.msra.mxu0 0.0
        %750 = vmatprep.subr.mxu0 0.0
        %751 = vmatpush1.msra.mxu0 0.0
        %752 = vmatprep.subr.mxu0 0.0
        %753 = vmatpush1.msra.mxu0 0.0
        %754 = vmatprep.subr.mxu0 0.0
        %755 = vmatpush1.msra.mxu0 0.0
        %756 = vmatprep.mubr.f32.mxu0 0.0
        %757 = vmatmul.mubr.f32.gmra.mrb[0].mxu0 %v690
        %v758 = vpop.f32.mrb[0].mxu0
        %v759 = vadd.f32 %v687, %v758
        %v760 = vpop.f32.mrb[0].mxu0
        %v761 = vadd.f32 %v687, %v760
        %762 = vdwg.mxu0
        %v763 = vadd.f32 %v759, %v335
        %v764 = vadd.f32 %v761, %v336
        %v765 = vmax.f32 %v763, 0.0
        %v766 = vmax.f32 %v764, 0.0
        %767 = vst [vmem:[%s334] sm:$0xff] %v765
        %768 = vst [vmem:[%s334 + $0x8] sm:$0xff] %v766
        %s769 = sand.u32 %s207, 1
        %s770 = scalar_lea.sflag [#allocation4], %s769
        %s771 = sand.u32 %s207, 1
        %s772 = smul.addr %s771, 16
        %s773 = scalar_lea.vmem [#allocation7], %s772
        // Predicated region
        $region61: #{tpu_custom_call.1} parent=51 // pred_check
          %p774 = pneg %p217
        $region62: #{tpu_custom_call.1} parent=51 // pred_check_branch
          %776 = sbr.rel (%p774) target = $region64
        $region63: #{tpu_custom_call.1} parent=51 // pred_region
          %s778 = ssub.s32 256, 256
          %779 = vsyncadd %s770, %s778
          %s780 = smul.addr %s26, 2
          %s781 = smul.addr %s780, 128
          %s782 = scalar_lea.hbm %s8, %s781
          %s784 = sshll.u32 %s773, 4
          %s785 = int_to_ptr.vmem [resolvable:$true] %s784
          %787 = dma.vmem_to_hbm [thread:$0]  %s785, 256, %s782, %s770
        $region64: #{tpu_custom_call.1} parent=51 // pred_fallthru
          _
      $region52: #{tpu_custom_call.1} parent=5 // pred_fallthru
        _
      %p788 = scmp.le.s32.totalorder 2, %s21
      // Predicated region
      $region65: #{tpu_custom_call.1} parent=5 // pred_check
        %p789 = pneg %p788
      $region66: #{tpu_custom_call.1} parent=5 // pred_check_branch
        %791 = sbr.rel (%p789) target = $region68
      $region67: #{tpu_custom_call.1} parent=5 // pred_region
        %s792 = ssub.s32 %s21, 2
        // Predicated region
        $region69: #{tpu_custom_call.1} parent=67 // pred_check
          %p793 = pneg %p223
        $region70: #{tpu_custom_call.1} parent=67 // pred_check_branch
          %795 = sbr.rel (%p793) target = $region72
        $region71: #{tpu_custom_call.1} parent=67 // pred_region
          %s796 = sand.u32 %s208, 1
          %s797 = scalar_lea.sflag [#allocation4], %s796
          %s798 = sand.u32 %s208, 1
          %s799 = smul.addr %s798, 16
          %s800 = scalar_lea.vmem [#allocation7], %s799
          %801 = dma.done %s797, 256
        $region72: #{tpu_custom_call.1} parent=67 // pred_fallthru
          _
      $region68: #{tpu_custom_call.1} parent=5 // pred_fallthru
        _
    $region6: #{tpu_custom_call.1} parent=1 // loop_footer
      %s25 = sadd.s32 1, %s21
    $region7: #{tpu_custom_call.1} parent=1 // loop_footer_branch
      %20 = sbr.rel target = $region3
    $region8: #{tpu_custom_call.1} parent=1 // loop_exit
      _
    %802 = vsyncpa [#allocation3], 1
    %s803 = scalar_lea.sflag [#allocation3], 1
    %804 = vsyncpa %s803, 1
    %805 = vsyncpa [#allocation6], 1
    %806 = vsyncpa [#allocation4], 1
    %s807 = scalar_lea.sflag [#allocation4], 1
    %808 = vsyncpa %s807, 1

</llo_original>
